<compile_context>
chip_gen: v7x
topology: tpu7x:2x2x1
jax: 0.10.0
libtpu: 0.0.40
codegen_flags: <defaults>
</compile_context>

<pallas_src>
import jax
import jax.numpy as jnp
from jax.experimental import pallas as pl
from jax.experimental.pallas import tpu as pltpu

IN_FEATURES = 3 * 28 * 28      # 2352
HIDDEN = 100
OUT_FEATURES = 10
LANE = 128                     # lane width: pad feature dims to this
SUBLANE = 8                    # sublane: pad batch dim to this


def _round_up(v, m):
    return (v + m - 1) // m * m


IN_PAD = _round_up(IN_FEATURES, LANE)       # 2432
HID_PAD = _round_up(HIDDEN, LANE)           # 128
OUT_PAD = _round_up(OUT_FEATURES, LANE)     # 128


def _mlp_kernel(x_ref, w1_ref, b1_ref, w2_ref, b2_ref, w3_ref, b3_ref, o_ref):
    """Fused Linear->ReLU->Linear->ReLU->Linear; one MXU matmul per layer."""
    x = x_ref[...]
    h = jnp.dot(x, w1_ref[...], preferred_element_type=jnp.float32) + b1_ref[...]
    h = jnp.maximum(h, 0.0)
    h = jnp.dot(h, w2_ref[...], preferred_element_type=jnp.float32) + b2_ref[...]
    h = jnp.maximum(h, 0.0)
    out = jnp.dot(h, w3_ref[...], preferred_element_type=jnp.float32) + b3_ref[...]
    o_ref[...] = out.astype(o_ref.dtype)


def prepare_params(w1, b1, w2, b2, w3, b3):
    """Zero-pad all feature dims up to lane multiples (128), once, outside the kernel.

    Weights are in (in_features, out_features) layout (PyTorch Linear weight transposed).
    """
    f32 = jnp.float32
    w1p = jnp.zeros((IN_PAD, HID_PAD), f32).at[:IN_FEATURES, :HIDDEN].set(w1.astype(f32))
    b1p = jnp.zeros((1, HID_PAD), f32).at[:, :HIDDEN].set(b1.astype(f32))
    w2p = jnp.zeros((HID_PAD, HID_PAD), f32).at[:HIDDEN, :HIDDEN].set(w2.astype(f32))
    b2p = jnp.zeros((1, HID_PAD), f32).at[:, :HIDDEN].set(b2.astype(f32))
    w3p = jnp.zeros((HID_PAD, OUT_PAD), f32).at[:HIDDEN, :OUT_FEATURES].set(w3.astype(f32))
    b3p = jnp.zeros((1, OUT_PAD), f32).at[:, :OUT_FEATURES].set(b3.astype(f32))
    return dict(w1=w1p, b1=b1p, w2=w2p, b2=b2p, w3=w3p, b3=b3p)


@jax.jit
def classifier_forward(x, params):
    """x: (N, 3*28*28) float32 -> logits (N, 10) float32."""
    N, D = x.shape
    assert D == IN_FEATURES, (N, D)

    # Batch tile: small batches run as a single block; large batches tile at 256
    # rows (grid axis is "parallel" so v7x shards tiles across its two cores).
    tm = min(256, _round_up(N, SUBLANE))
    Np = _round_up(N, tm)

    # Pad batch to tile multiple and input features to lane multiple (zero pad).
    xp = jnp.pad(x.astype(jnp.float32), ((0, Np - N), (0, IN_PAD - D)))

    w1, b1 = params['w1'], params['b1']
    w2, b2 = params['w2'], params['b2']
    w3, b3 = params['w3'], params['b3']

    out = pl.pallas_call(
        _mlp_kernel,
        out_shape=jax.ShapeDtypeStruct((Np, OUT_PAD), jnp.float32),
        grid=(Np // tm,),
        in_specs=[
            pl.BlockSpec((tm, IN_PAD), lambda i: (i, 0)),
            # Weights / biases: constant block index -> DMA'd once, VMEM-resident.
            pl.BlockSpec(w1.shape, lambda i: (0, 0)),
            pl.BlockSpec(b1.shape, lambda i: (0, 0)),
            pl.BlockSpec(w2.shape, lambda i: (0, 0)),
            pl.BlockSpec(b2.shape, lambda i: (0, 0)),
            pl.BlockSpec(w3.shape, lambda i: (0, 0)),
            pl.BlockSpec(b3.shape, lambda i: (0, 0)),
        ],
        out_specs=pl.BlockSpec((tm, OUT_PAD), lambda i: (i, 0)),
        compiler_params=pltpu.CompilerParams(
            dimension_semantics=("parallel",),
        ),
    )(xp, w1, b1, w2, b2, w3, b3)

    # Slice away batch / feature padding.
    return out[:N, :OUT_FEATURES]


def reference_forward(x, w1, b1, w2, b2, w3, b3):
    """Pure-JAX reference (high-precision matmuls) for the correctness check."""
    hi = jax.lax.Precision.HIGHEST
    h = jnp.maximum(jnp.dot(x, w1, precision=hi) + b1, 0.0)
    h = jnp.maximum(jnp.dot(h, w2, precision=hi) + b2, 0.0)
    return jnp.dot(h, w3, precision=hi) + b3


if __name__ == "__main__":
    key = jax.random.PRNGKey(0)
    ks = jax.random.split(key, 7)

    N = 2
    x = jax.random.normal(ks[0], (N, IN_FEATURES), jnp.float32)

    # Deterministic synthetic parameters (PyTorch Linear weight transposed to (in, out)).
    w1 = 0.02 * jax.random.normal(ks[1], (IN_FEATURES, HIDDEN), jnp.float32)
    b1 = 0.02 * jax.random.normal(ks[2], (HIDDEN,), jnp.float32)
    w2 = 0.10 * jax.random.normal(ks[3], (HIDDEN, HIDDEN), jnp.float32)
    b2 = 0.10 * jax.random.normal(ks[4], (HIDDEN,), jnp.float32)
    w3 = 0.10 * jax.random.normal(ks[5], (HIDDEN, OUT_FEATURES), jnp.float32)
    b3 = 0.10 * jax.random.normal(ks[6], (OUT_FEATURES,), jnp.float32)

    params = prepare_params(w1, b1, w2, b2, w3, b3)

    out = classifier_forward(x, params)
    out = jax.block_until_ready(out)
    assert out.shape == (N, OUT_FEATURES), out.shape

    ref = reference_forward(x, w1, b1, w2, b2, w3, b3)
    err = float(jnp.max(jnp.abs(out - ref)))
    assert bool(jnp.allclose(out, ref, rtol=1e-2, atol=1e-2)), f"max abs err {err}"
    print("KERNEL_OK")
</pallas_src>

<mosaic_0001>
module attributes {stable_mosaic.version = 11 : i64} {
  func.func @_mlp_kernel(%arg0: i32, %arg1: memref<8x2432xf32, #tpu.memory_space<vmem>>, %arg2: memref<2432x128xf32, #tpu.memory_space<vmem>>, %arg3: memref<1x128xf32, #tpu.memory_space<vmem>>, %arg4: memref<128x128xf32, #tpu.memory_space<vmem>>, %arg5: memref<1x128xf32, #tpu.memory_space<vmem>>, %arg6: memref<128x128xf32, #tpu.memory_space<vmem>>, %arg7: memref<1x128xf32, #tpu.memory_space<vmem>>, %arg8: memref<8x128xf32, #tpu.memory_space<vmem>>) attributes {dimension_semantics = [#tpu.dimension_semantics<parallel>], iteration_bounds = array<i64: 1>, scalar_prefetch = 0 : i64, scratch_operands = 0 : i64, tpu.core_type = #tpu.core_type<tc>, window_params = [{transform_indices = @transform_0, window_bounds = array<i64: 8, 2432>}, {pipeline_mode = #tpu.pipeline_mode<synchronous>, transform_indices = @transform_1, window_bounds = array<i64: 2432, 128>}, {pipeline_mode = #tpu.pipeline_mode<synchronous>, transform_indices = @transform_2, window_bounds = array<i64: 1, 128>}, {pipeline_mode = #tpu.pipeline_mode<synchronous>, transform_indices = @transform_3, window_bounds = array<i64: 128, 128>}, {pipeline_mode = #tpu.pipeline_mode<synchronous>, transform_indices = @transform_4, window_bounds = array<i64: 1, 128>}, {pipeline_mode = #tpu.pipeline_mode<synchronous>, transform_indices = @transform_5, window_bounds = array<i64: 128, 128>}, {pipeline_mode = #tpu.pipeline_mode<synchronous>, transform_indices = @transform_6, window_bounds = array<i64: 1, 128>}, {transform_indices = @transform_7, window_bounds = array<i64: 8, 128>}]} {
    %c0 = arith.constant 0 : index
    %c0_0 = arith.constant 0 : index
    %0 = vector.load %arg1[%c0, %c0_0] : memref<8x2432xf32, #tpu.memory_space<vmem>>, vector<8x2432xf32>
    %c0_1 = arith.constant 0 : index
    %c0_2 = arith.constant 0 : index
    %1 = vector.load %arg2[%c0_1, %c0_2] : memref<2432x128xf32, #tpu.memory_space<vmem>>, vector<2432x128xf32>
    %cst = arith.constant dense<0.000000e+00> : vector<8x128xf32>
    %2 = tpu.matmul %0, %1, %cst {dimension_numbers = #tpu.dot_dimension_numbers<[1], [0], [0], [1], [0, 0, 1, 1], [], []>} : vector<8x2432xf32>, vector<2432x128xf32>, vector<8x128xf32> -> vector<8x128xf32>
    %c0_3 = arith.constant 0 : index
    %c0_4 = arith.constant 0 : index
    %3 = vector.load %arg3[%c0_3, %c0_4] : memref<1x128xf32, #tpu.memory_space<vmem>>, vector<1x128xf32>
    %4 = vector.broadcast %3 : vector<1x128xf32> to vector<8x128xf32>
    %5 = arith.addf %2, %4 : vector<8x128xf32>
    %cst_5 = arith.constant 0.000000e+00 : f32
    %6 = vector.broadcast %cst_5 : f32 to vector<8x128xf32>
    %7 = arith.maximumf %5, %6 : vector<8x128xf32>
    %c0_6 = arith.constant 0 : index
    %c0_7 = arith.constant 0 : index
    %8 = vector.load %arg4[%c0_6, %c0_7] : memref<128x128xf32, #tpu.memory_space<vmem>>, vector<128x128xf32>
    %cst_8 = arith.constant dense<0.000000e+00> : vector<8x128xf32>
    %9 = tpu.matmul %7, %8, %cst_8 {dimension_numbers = #tpu.dot_dimension_numbers<[1], [0], [0], [1], [0, 0, 1, 1], [], []>} : vector<8x128xf32>, vector<128x128xf32>, vector<8x128xf32> -> vector<8x128xf32>
    %c0_9 = arith.constant 0 : index
    %c0_10 = arith.constant 0 : index
    %10 = vector.load %arg5[%c0_9, %c0_10] : memref<1x128xf32, #tpu.memory_space<vmem>>, vector<1x128xf32>
    %11 = vector.broadcast %10 : vector<1x128xf32> to vector<8x128xf32>
    %12 = arith.addf %9, %11 : vector<8x128xf32>
    %cst_11 = arith.constant 0.000000e+00 : f32
    %13 = vector.broadcast %cst_11 : f32 to vector<8x128xf32>
    %14 = arith.maximumf %12, %13 : vector<8x128xf32>
    %c0_12 = arith.constant 0 : index
    %c0_13 = arith.constant 0 : index
    %15 = vector.load %arg6[%c0_12, %c0_13] : memref<128x128xf32, #tpu.memory_space<vmem>>, vector<128x128xf32>
    %cst_14 = arith.constant dense<0.000000e+00> : vector<8x128xf32>
    %16 = tpu.matmul %14, %15, %cst_14 {dimension_numbers = #tpu.dot_dimension_numbers<[1], [0], [0], [1], [0, 0, 1, 1], [], []>} : vector<8x128xf32>, vector<128x128xf32>, vector<8x128xf32> -> vector<8x128xf32>
    %c0_15 = arith.constant 0 : index
    %c0_16 = arith.constant 0 : index
    %17 = vector.load %arg7[%c0_15, %c0_16] : memref<1x128xf32, #tpu.memory_space<vmem>>, vector<1x128xf32>
    %18 = vector.broadcast %17 : vector<1x128xf32> to vector<8x128xf32>
    %19 = arith.addf %16, %18 : vector<8x128xf32>
    %c0_17 = arith.constant 0 : index
    %c0_18 = arith.constant 0 : index
    %20 = vector.load %arg8[%c0_17, %c0_18] : memref<8x128xf32, #tpu.memory_space<vmem>>, vector<8x128xf32>
    tpu.vector_store %arg8[%c0_17, %c0_18], %19 {strides = array<i32>} : memref<8x128xf32, #tpu.memory_space<vmem>>, vector<8x128xf32>,
    return
  }
  func.func @transform_0(%arg0: i32) -> (i32, i32) {
    %c0_i32 = arith.constant 0 : i32
    %c0_i32_0 = arith.constant 0 : i32
    return %arg0, %c0_i32 : i32, i32
  }
  func.func @transform_1(%arg0: i32) -> (i32, i32) {
    %c0_i32 = arith.constant 0 : i32
    %c0_i32_0 = arith.constant 0 : i32
    %c0_i32_1 = arith.constant 0 : i32
    return %c0_i32, %c0_i32_0 : i32, i32
  }
  func.func @transform_2(%arg0: i32) -> (i32, i32) {
    %c0_i32 = arith.constant 0 : i32
    %c0_i32_0 = arith.constant 0 : i32
    %c0_i32_1 = arith.constant 0 : i32
    return %c0_i32, %c0_i32_0 : i32, i32
  }
  func.func @transform_3(%arg0: i32) -> (i32, i32) {
    %c0_i32 = arith.constant 0 : i32
    %c0_i32_0 = arith.constant 0 : i32
    %c0_i32_1 = arith.constant 0 : i32
    return %c0_i32, %c0_i32_0 : i32, i32
  }
  func.func @transform_4(%arg0: i32) -> (i32, i32) {
    %c0_i32 = arith.constant 0 : i32
    %c0_i32_0 = arith.constant 0 : i32
    %c0_i32_1 = arith.constant 0 : i32
    return %c0_i32, %c0_i32_0 : i32, i32
  }
  func.func @transform_5(%arg0: i32) -> (i32, i32) {
    %c0_i32 = arith.constant 0 : i32
    %c0_i32_0 = arith.constant 0 : i32
    %c0_i32_1 = arith.constant 0 : i32
    return %c0_i32, %c0_i32_0 : i32, i32
  }
  func.func @transform_6(%arg0: i32) -> (i32, i32) {
    %c0_i32 = arith.constant 0 : i32
    %c0_i32_0 = arith.constant 0 : i32
    %c0_i32_1 = arith.constant 0 : i32
    return %c0_i32, %c0_i32_0 : i32, i32
  }
  func.func @transform_7(%arg0: i32) -> (i32, i32) {
    %c0_i32 = arith.constant 0 : i32
    %c0_i32_0 = arith.constant 0 : i32
    return %arg0, %c0_i32 : i32, i32
  }
}

</mosaic_0001>

<llo_original>
// kernel: classifier_forward.1
$region0: #{classifier_forward.1}
  #allocation0 [shape = 'u32[]', space=smem, size = 0x4, offset = 0x4, fixed_abs, tag = 'smem constant byte address 0x4 - core index']
  #allocation1 [shape = 'u32[144,128]{1,0:T(1,128)}', space=vmem, size = 0x12000, scoped, tag = 'internal scratch']
  %s0 = inlined_call_operand.vmem [shape: f32[8,2432], index: 0, kind: input, shape index: {}]
  %s1 = inlined_call_operand.hbm [shape: f32[2432,128], index: 1, kind: input, shape index: {}]
  %s2 = inlined_call_operand.hbm [shape: f32[1,128], index: 2, kind: input, shape index: {}]
  %s3 = inlined_call_operand.hbm [shape: f32[128,128], index: 3, kind: input, shape index: {}]
  %s4 = inlined_call_operand.hbm [shape: f32[1,128], index: 4, kind: input, shape index: {}]
  %s5 = inlined_call_operand.hbm [shape: f32[128,128], index: 5, kind: input, shape index: {}]
  %s6 = inlined_call_operand.hbm [shape: f32[1,128], index: 6, kind: input, shape index: {}]
  %s7 = inlined_call_operand.vmem [shape: f32[8,128], index: 7, kind: output, shape index: {}]
  %s8 = sld [smem:[#allocation0]]
  $region62: #{classifier_forward.1} parent=0
    _
  %s10 = ssub.s32 1, %s8
  %s11 = scalar_select 0, %s10, %s8
  $region1: #{classifier_forward.1} parent=0
    #allocation2 [shape = 'u8[1245184]{0}', space=vmem, size = 0x130000, scoped, tag = 'input window, operand 1, single buffered']
    #allocation3 [shape = 's32[1]{0}', space=sflag, size = 0x4, scoped, tag = 'scoped memory for classifier_forward.1']
    #allocation4 [shape = 'u8[512]{0}', space=vmem, size = 0x400, scoped, tag = 'input window, operand 2, single buffered']
    #allocation5 [shape = 's32[1]{0}', space=sflag, size = 0x4, scoped, tag = 'scoped memory for classifier_forward.1']
    #allocation6 [shape = 'u8[65536]{0}', space=vmem, size = 0x10000, scoped, tag = 'input window, operand 3, single buffered']
    #allocation7 [shape = 'u8[512]{0}', space=vmem, size = 0x400, scoped, tag = 'input window, operand 4, single buffered']
    #allocation8 [shape = 's32[1]{0}', space=sflag, size = 0x4, scoped, tag = 'scoped memory for classifier_forward.1']
    #allocation9 [shape = 'u8[65536]{0}', space=vmem, size = 0x10000, scoped, tag = 'input window, operand 5, single buffered']
    #allocation10 [shape = 'u8[512]{0}', space=vmem, size = 0x400, scoped, tag = 'input window, operand 6, single buffered']
    #allocation11 [shape = 's32[1]{0}', space=sflag, size = 0x4, scoped, tag = 'scoped memory for classifier_forward.1']
    %12 = vsyncpa [#allocation3], 0
    %13 = vsyncpa [#allocation5], 0
    %14 = vsyncpa [#allocation8], 0
    %15 = vsyncpa [#allocation11], 0
    // Predicated region
    $region2: #{classifier_forward.1} parent=1 // pred_check
      _
    $region3: #{classifier_forward.1} parent=1 // pred_check_branch
      %17 = sbr.rel (0) target = $region5
    $region4: #{classifier_forward.1} parent=1 // pred_region
      _
    $region5: #{classifier_forward.1} parent=1 // pred_fallthru
      _
    // Predicated region
    $region6: #{classifier_forward.1} parent=1 // pred_check
      _
    $region7: #{classifier_forward.1} parent=1 // pred_check_branch
      %19 = sbr.rel (0) target = $region9
    $region8: #{classifier_forward.1} parent=1 // pred_region
      %s21 = ssub.s32 38912, 38912
      %22 = vsyncadd [#allocation3], %s21
      %s23 = sshll.u32 [#allocation2], 4
      %s24 = int_to_ptr.vmem [resolvable:$true] %s23
      %29 = dma.hbm_to_vmem [thread:$0]  %s1, 38912, %s24, [#allocation3], 128, 128, 8
    $region9: #{classifier_forward.1} parent=1 // pred_fallthru
      _
    // Predicated region
    $region10: #{classifier_forward.1} parent=1 // pred_check
      _
    $region11: #{classifier_forward.1} parent=1 // pred_check_branch
      %31 = sbr.rel (0) target = $region13
    $region12: #{classifier_forward.1} parent=1 // pred_region
      %s33 = ssub.s32 16, 16
      %34 = vsyncadd [#allocation5], %s33
      %s36 = sshll.u32 [#allocation4], 4
      %s37 = int_to_ptr.vmem [resolvable:$true] %s36
      %39 = dma.hbm_to_vmem [thread:$0]  %s2, 16, %s37, [#allocation5]
    $region13: #{classifier_forward.1} parent=1 // pred_fallthru
      _
    // Predicated region
    $region14: #{classifier_forward.1} parent=1 // pred_check
      _
    $region15: #{classifier_forward.1} parent=1 // pred_check_branch
      %41 = sbr.rel (0) target = $region17
    $region16: #{classifier_forward.1} parent=1 // pred_region
      %s43 = ssub.s32 2048, 2048
      %44 = vsyncadd [#allocation5], %s43
      %s45 = sshll.u32 [#allocation6], 4
      %s46 = int_to_ptr.vmem [resolvable:$true] %s45
      %51 = dma.hbm_to_vmem [thread:$0]  %s3, 2048, %s46, [#allocation5], 128, 128, 8
    $region17: #{classifier_forward.1} parent=1 // pred_fallthru
      _
    // Predicated region
    $region18: #{classifier_forward.1} parent=1 // pred_check
      _
    $region19: #{classifier_forward.1} parent=1 // pred_check_branch
      %53 = sbr.rel (0) target = $region21
    $region20: #{classifier_forward.1} parent=1 // pred_region
      %s55 = ssub.s32 16, 16
      %56 = vsyncadd [#allocation8], %s55
      %s58 = sshll.u32 [#allocation7], 4
      %s59 = int_to_ptr.vmem [resolvable:$true] %s58
      %61 = dma.hbm_to_vmem [thread:$0]  %s4, 16, %s59, [#allocation8]
    $region21: #{classifier_forward.1} parent=1 // pred_fallthru
      _
    // Predicated region
    $region22: #{classifier_forward.1} parent=1 // pred_check
      _
    $region23: #{classifier_forward.1} parent=1 // pred_check_branch
      %63 = sbr.rel (0) target = $region25
    $region24: #{classifier_forward.1} parent=1 // pred_region
      %s65 = ssub.s32 2048, 2048
      %66 = vsyncadd [#allocation8], %s65
      %s67 = sshll.u32 [#allocation9], 4
      %s68 = int_to_ptr.vmem [resolvable:$true] %s67
      %73 = dma.hbm_to_vmem [thread:$0]  %s5, 2048, %s68, [#allocation8], 128, 128, 8
    $region25: #{classifier_forward.1} parent=1 // pred_fallthru
      _
    // Predicated region
    $region26: #{classifier_forward.1} parent=1 // pred_check
      _
    $region27: #{classifier_forward.1} parent=1 // pred_check_branch
      %75 = sbr.rel (0) target = $region29
    $region28: #{classifier_forward.1} parent=1 // pred_region
      %s77 = ssub.s32 16, 16
      %78 = vsyncadd [#allocation11], %s77
      %s80 = sshll.u32 [#allocation10], 4
      %s81 = int_to_ptr.vmem [resolvable:$true] %s80
      %83 = dma.hbm_to_vmem [thread:$0]  %s6, 16, %s81, [#allocation11]
    $region29: #{classifier_forward.1} parent=1 // pred_fallthru
      _
    // Predicated region
    $region30: #{classifier_forward.1} parent=1 // pred_check
      _
    $region31: #{classifier_forward.1} parent=1 // pred_check_branch
      %85 = sbr.rel (0) target = $region33
    $region32: #{classifier_forward.1} parent=1 // pred_region
      %86 = dma.done [#allocation3], 38912
    $region33: #{classifier_forward.1} parent=1 // pred_fallthru
      _
    // Predicated region
    $region34: #{classifier_forward.1} parent=1 // pred_check
      _
    $region35: #{classifier_forward.1} parent=1 // pred_check_branch
      %88 = sbr.rel (0) target = $region37
    $region36: #{classifier_forward.1} parent=1 // pred_region
      %89 = dma.done [#allocation5], 16
    $region37: #{classifier_forward.1} parent=1 // pred_fallthru
      _
    // Predicated region
    $region38: #{classifier_forward.1} parent=1 // pred_check
      _
    $region39: #{classifier_forward.1} parent=1 // pred_check_branch
      %91 = sbr.rel (0) target = $region41
    $region40: #{classifier_forward.1} parent=1 // pred_region
      %92 = dma.done [#allocation5], 2048
    $region41: #{classifier_forward.1} parent=1 // pred_fallthru
      _
    // Predicated region
    $region42: #{classifier_forward.1} parent=1 // pred_check
      _
    $region43: #{classifier_forward.1} parent=1 // pred_check_branch
      %94 = sbr.rel (0) target = $region45
    $region44: #{classifier_forward.1} parent=1 // pred_region
      %95 = dma.done [#allocation8], 16
    $region45: #{classifier_forward.1} parent=1 // pred_fallthru
      _
    // Predicated region
    $region46: #{classifier_forward.1} parent=1 // pred_check
      _
    $region47: #{classifier_forward.1} parent=1 // pred_check_branch
      %97 = sbr.rel (0) target = $region49
    $region48: #{classifier_forward.1} parent=1 // pred_region
      %98 = dma.done [#allocation8], 2048
    $region49: #{classifier_forward.1} parent=1 // pred_fallthru
      _
    // Predicated region
    $region50: #{classifier_forward.1} parent=1 // pred_check
      _
    $region51: #{classifier_forward.1} parent=1 // pred_check_branch
      %100 = sbr.rel (0) target = $region53
    $region52: #{classifier_forward.1} parent=1 // pred_region
      %101 = dma.done [#allocation11], 16
    $region53: #{classifier_forward.1} parent=1 // pred_fallthru
      _
    %v102 = vld [vmem:[%s0] sm:$0xff]
    %v103 = vld [vmem:[%s0 + $0x8] sm:$0xff]
    %v104 = vld [vmem:[%s0 + $0x10] sm:$0xff]
    %v105 = vld [vmem:[%s0 + $0x18] sm:$0xff]
    %v106 = vld [vmem:[%s0 + $0x20] sm:$0xff]
    %v107 = vld [vmem:[%s0 + $0x28] sm:$0xff]
    %v108 = vld [vmem:[%s0 + $0x30] sm:$0xff]
    %v109 = vld [vmem:[%s0 + $0x38] sm:$0xff]
    %v110 = vld [vmem:[%s0 + $0x40] sm:$0xff]
    %v111 = vld [vmem:[%s0 + $0x48] sm:$0xff]
    %v112 = vld [vmem:[%s0 + $0x50] sm:$0xff]
    %v113 = vld [vmem:[%s0 + $0x58] sm:$0xff]
    %v114 = vld [vmem:[%s0 + $0x60] sm:$0xff]
    %v115 = vld [vmem:[%s0 + $0x68] sm:$0xff]
    %v116 = vld [vmem:[%s0 + $0x70] sm:$0xff]
    %v117 = vld [vmem:[%s0 + $0x78] sm:$0xff]
    %v118 = vld [vmem:[%s0 + $0x80] sm:$0xff]
    %v119 = vld [vmem:[%s0 + $0x88] sm:$0xff]
    %v120 = vld [vmem:[%s0 + $0x90] sm:$0xff]
    %v121 = vld [vmem:[#allocation2] sm:$0xff]
    %v122 = vld [vmem:[#allocation2 + $0x8] sm:$0xff]
    %v123 = vld [vmem:[#allocation2 + $0x10] sm:$0xff]
    %v124 = vld [vmem:[#allocation2 + $0x18] sm:$0xff]
    %v125 = vld [vmem:[#allocation2 + $0x20] sm:$0xff]
    %v126 = vld [vmem:[#allocation2 + $0x28] sm:$0xff]
    %v127 = vld [vmem:[#allocation2 + $0x30] sm:$0xff]
    %v128 = vld [vmem:[#allocation2 + $0x38] sm:$0xff]
    %v129 = vld [vmem:[#allocation2 + $0x40] sm:$0xff]
    %v130 = vld [vmem:[#allocation2 + $0x48] sm:$0xff]
    %v131 = vld [vmem:[#allocation2 + $0x50] sm:$0xff]
    %v132 = vld [vmem:[#allocation2 + $0x58] sm:$0xff]
    %v133 = vld [vmem:[#allocation2 + $0x60] sm:$0xff]
    %v134 = vld [vmem:[#allocation2 + $0x68] sm:$0xff]
    %v135 = vld [vmem:[#allocation2 + $0x70] sm:$0xff]
    %v136 = vld [vmem:[#allocation2 + $0x78] sm:$0xff]
    %v137 = vld [vmem:[#allocation2 + $0x80] sm:$0xff]
    %v138 = vld [vmem:[#allocation2 + $0x88] sm:$0xff]
    %v139 = vld [vmem:[#allocation2 + $0x90] sm:$0xff]
    %v140 = vld [vmem:[#allocation2 + $0x98] sm:$0xff]
    %v141 = vld [vmem:[#allocation2 + $0xa0] sm:$0xff]
    %v142 = vld [vmem:[#allocation2 + $0xa8] sm:$0xff]
    %v143 = vld [vmem:[#allocation2 + $0xb0] sm:$0xff]
    %v144 = vld [vmem:[#allocation2 + $0xb8] sm:$0xff]
    %v145 = vld [vmem:[#allocation2 + $0xc0] sm:$0xff]
    %v146 = vld [vmem:[#allocation2 + $0xc8] sm:$0xff]
    %v147 = vld [vmem:[#allocation2 + $0xd0] sm:$0xff]
    %v148 = vld [vmem:[#allocation2 + $0xd8] sm:$0xff]
    %v149 = vld [vmem:[#allocation2 + $0xe0] sm:$0xff]
    %v150 = vld [vmem:[#allocation2 + $0xe8] sm:$0xff]
    %v151 = vld [vmem:[#allocation2 + $0xf0] sm:$0xff]
    %v152 = vld [vmem:[#allocation2 + $0xf8] sm:$0xff]
    %v153 = vld [vmem:[#allocation2 + $0x100] sm:$0xff]
    %v154 = vld [vmem:[#allocation2 + $0x108] sm:$0xff]
    %v155 = vld [vmem:[#allocation2 + $0x110] sm:$0xff]
    %v156 = vld [vmem:[#allocation2 + $0x118] sm:$0xff]
    %v157 = vld [vmem:[#allocation2 + $0x120] sm:$0xff]
    %v158 = vld [vmem:[#allocation2 + $0x128] sm:$0xff]
    %v159 = vld [vmem:[#allocation2 + $0x130] sm:$0xff]
    %v160 = vld [vmem:[#allocation2 + $0x138] sm:$0xff]
    %v161 = vld [vmem:[#allocation2 + $0x140] sm:$0xff]
    %v162 = vld [vmem:[#allocation2 + $0x148] sm:$0xff]
    %v163 = vld [vmem:[#allocation2 + $0x150] sm:$0xff]
    %v164 = vld [vmem:[#allocation2 + $0x158] sm:$0xff]
    %v165 = vld [vmem:[#allocation2 + $0x160] sm:$0xff]
    %v166 = vld [vmem:[#allocation2 + $0x168] sm:$0xff]
    %v167 = vld [vmem:[#allocation2 + $0x170] sm:$0xff]
    %v168 = vld [vmem:[#allocation2 + $0x178] sm:$0xff]
    %v169 = vld [vmem:[#allocation2 + $0x180] sm:$0xff]
    %v170 = vld [vmem:[#allocation2 + $0x188] sm:$0xff]
    %v171 = vld [vmem:[#allocation2 + $0x190] sm:$0xff]
    %v172 = vld [vmem:[#allocation2 + $0x198] sm:$0xff]
    %v173 = vld [vmem:[#allocation2 + $0x1a0] sm:$0xff]
    %v174 = vld [vmem:[#allocation2 + $0x1a8] sm:$0xff]
    %v175 = vld [vmem:[#allocation2 + $0x1b0] sm:$0xff]
    %v176 = vld [vmem:[#allocation2 + $0x1b8] sm:$0xff]
    %v177 = vld [vmem:[#allocation2 + $0x1c0] sm:$0xff]
    %v178 = vld [vmem:[#allocation2 + $0x1c8] sm:$0xff]
    %v179 = vld [vmem:[#allocation2 + $0x1d0] sm:$0xff]
    %v180 = vld [vmem:[#allocation2 + $0x1d8] sm:$0xff]
    %v181 = vld [vmem:[#allocation2 + $0x1e0] sm:$0xff]
    %v182 = vld [vmem:[#allocation2 + $0x1e8] sm:$0xff]
    %v183 = vld [vmem:[#allocation2 + $0x1f0] sm:$0xff]
    %v184 = vld [vmem:[#allocation2 + $0x1f8] sm:$0xff]
    %v185 = vld [vmem:[#allocation2 + $0x200] sm:$0xff]
    %v186 = vld [vmem:[#allocation2 + $0x208] sm:$0xff]
    %v187 = vld [vmem:[#allocation2 + $0x210] sm:$0xff]
    %v188 = vld [vmem:[#allocation2 + $0x218] sm:$0xff]
    %v189 = vld [vmem:[#allocation2 + $0x220] sm:$0xff]
    %v190 = vld [vmem:[#allocation2 + $0x228] sm:$0xff]
    %v191 = vld [vmem:[#allocation2 + $0x230] sm:$0xff]
    %v192 = vld [vmem:[#allocation2 + $0x238] sm:$0xff]
    %v193 = vld [vmem:[#allocation2 + $0x240] sm:$0xff]
    %v194 = vld [vmem:[#allocation2 + $0x248] sm:$0xff]
    %v195 = vld [vmem:[#allocation2 + $0x250] sm:$0xff]
    %v196 = vld [vmem:[#allocation2 + $0x258] sm:$0xff]
    %v197 = vld [vmem:[#allocation2 + $0x260] sm:$0xff]
    %v198 = vld [vmem:[#allocation2 + $0x268] sm:$0xff]
    %v199 = vld [vmem:[#allocation2 + $0x270] sm:$0xff]
    %v200 = vld [vmem:[#allocation2 + $0x278] sm:$0xff]
    %v201 = vld [vmem:[#allocation2 + $0x280] sm:$0xff]
    %v202 = vld [vmem:[#allocation2 + $0x288] sm:$0xff]
    %v203 = vld [vmem:[#allocation2 + $0x290] sm:$0xff]
    %v204 = vld [vmem:[#allocation2 + $0x298] sm:$0xff]
    %v205 = vld [vmem:[#allocation2 + $0x2a0] sm:$0xff]
    %v206 = vld [vmem:[#allocation2 + $0x2a8] sm:$0xff]
    %v207 = vld [vmem:[#allocation2 + $0x2b0] sm:$0xff]
    %v208 = vld [vmem:[#allocation2 + $0x2b8] sm:$0xff]
    %v209 = vld [vmem:[#allocation2 + $0x2c0] sm:$0xff]
    %v210 = vld [vmem:[#allocation2 + $0x2c8] sm:$0xff]
    %v211 = vld [vmem:[#allocation2 + $0x2d0] sm:$0xff]
    %v212 = vld [vmem:[#allocation2 + $0x2d8] sm:$0xff]
    %v213 = vld [vmem:[#allocation2 + $0x2e0] sm:$0xff]
    %v214 = vld [vmem:[#allocation2 + $0x2e8] sm:$0xff]
    %v215 = vld [vmem:[#allocation2 + $0x2f0] sm:$0xff]
    %v216 = vld [vmem:[#allocation2 + $0x2f8] sm:$0xff]
    %v217 = vld [vmem:[#allocation2 + $0x300] sm:$0xff]
    %v218 = vld [vmem:[#allocation2 + $0x308] sm:$0xff]
    %v219 = vld [vmem:[#allocation2 + $0x310] sm:$0xff]
    %v220 = vld [vmem:[#allocation2 + $0x318] sm:$0xff]
    %v221 = vld [vmem:[#allocation2 + $0x320] sm:$0xff]
    %v222 = vld [vmem:[#allocation2 + $0x328] sm:$0xff]
    %v223 = vld [vmem:[#allocation2 + $0x330] sm:$0xff]
    %v224 = vld [vmem:[#allocation2 + $0x338] sm:$0xff]
    %v225 = vld [vmem:[#allocation2 + $0x340] sm:$0xff]
    %v226 = vld [vmem:[#allocation2 + $0x348] sm:$0xff]
    %v227 = vld [vmem:[#allocation2 + $0x350] sm:$0xff]
    %v228 = vld [vmem:[#allocation2 + $0x358] sm:$0xff]
    %v229 = vld [vmem:[#allocation2 + $0x360] sm:$0xff]
    %v230 = vld [vmem:[#allocation2 + $0x368] sm:$0xff]
    %v231 = vld [vmem:[#allocation2 + $0x370] sm:$0xff]
    %v232 = vld [vmem:[#allocation2 + $0x378] sm:$0xff]
    %v233 = vld [vmem:[#allocation2 + $0x380] sm:$0xff]
    %v234 = vld [vmem:[#allocation2 + $0x388] sm:$0xff]
    %v235 = vld [vmem:[#allocation2 + $0x390] sm:$0xff]
    %v236 = vld [vmem:[#allocation2 + $0x398] sm:$0xff]
    %v237 = vld [vmem:[#allocation2 + $0x3a0] sm:$0xff]
    %v238 = vld [vmem:[#allocation2 + $0x3a8] sm:$0xff]
    %v239 = vld [vmem:[#allocation2 + $0x3b0] sm:$0xff]
    %v240 = vld [vmem:[#allocation2 + $0x3b8] sm:$0xff]
    %v241 = vld [vmem:[#allocation2 + $0x3c0] sm:$0xff]
    %v242 = vld [vmem:[#allocation2 + $0x3c8] sm:$0xff]
    %v243 = vld [vmem:[#allocation2 + $0x3d0] sm:$0xff]
    %v244 = vld [vmem:[#allocation2 + $0x3d8] sm:$0xff]
    %v245 = vld [vmem:[#allocation2 + $0x3e0] sm:$0xff]
    %v246 = vld [vmem:[#allocation2 + $0x3e8] sm:$0xff]
    %v247 = vld [vmem:[#allocation2 + $0x3f0] sm:$0xff]
    %v248 = vld [vmem:[#allocation2 + $0x3f8] sm:$0xff]
    %v249 = vld [vmem:[#allocation2 + $0x400] sm:$0xff]
    %v250 = vld [vmem:[#allocation2 + $0x408] sm:$0xff]
    %v251 = vld [vmem:[#allocation2 + $0x410] sm:$0xff]
    %v252 = vld [vmem:[#allocation2 + $0x418] sm:$0xff]
    %v253 = vld [vmem:[#allocation2 + $0x420] sm:$0xff]
    %v254 = vld [vmem:[#allocation2 + $0x428] sm:$0xff]
    %v255 = vld [vmem:[#allocation2 + $0x430] sm:$0xff]
    %v256 = vld [vmem:[#allocation2 + $0x438] sm:$0xff]
    %v257 = vld [vmem:[#allocation2 + $0x440] sm:$0xff]
    %v258 = vld [vmem:[#allocation2 + $0x448] sm:$0xff]
    %v259 = vld [vmem:[#allocation2 + $0x450] sm:$0xff]
    %v260 = vld [vmem:[#allocation2 + $0x458] sm:$0xff]
    %v261 = vld [vmem:[#allocation2 + $0x460] sm:$0xff]
    %v262 = vld [vmem:[#allocation2 + $0x468] sm:$0xff]
    %v263 = vld [vmem:[#allocation2 + $0x470] sm:$0xff]
    %v264 = vld [vmem:[#allocation2 + $0x478] sm:$0xff]
    %v265 = vld [vmem:[#allocation2 + $0x480] sm:$0xff]
    %v266 = vld [vmem:[#allocation2 + $0x488] sm:$0xff]
    %v267 = vld [vmem:[#allocation2 + $0x490] sm:$0xff]
    %v268 = vld [vmem:[#allocation2 + $0x498] sm:$0xff]
    %v269 = vld [vmem:[#allocation2 + $0x4a0] sm:$0xff]
    %v270 = vld [vmem:[#allocation2 + $0x4a8] sm:$0xff]
    %v271 = vld [vmem:[#allocation2 + $0x4b0] sm:$0xff]
    %v272 = vld [vmem:[#allocation2 + $0x4b8] sm:$0xff]
    %v273 = vld [vmem:[#allocation2 + $0x4c0] sm:$0xff]
    %v274 = vld [vmem:[#allocation2 + $0x4c8] sm:$0xff]
    %v275 = vld [vmem:[#allocation2 + $0x4d0] sm:$0xff]
    %v276 = vld [vmem:[#allocation2 + $0x4d8] sm:$0xff]
    %v277 = vld [vmem:[#allocation2 + $0x4e0] sm:$0xff]
    %v278 = vld [vmem:[#allocation2 + $0x4e8] sm:$0xff]
    %v279 = vld [vmem:[#allocation2 + $0x4f0] sm:$0xff]
    %v280 = vld [vmem:[#allocation2 + $0x4f8] sm:$0xff]
    %v281 = vld [vmem:[#allocation2 + $0x500] sm:$0xff]
    %v282 = vld [vmem:[#allocation2 + $0x508] sm:$0xff]
    %v283 = vld [vmem:[#allocation2 + $0x510] sm:$0xff]
    %v284 = vld [vmem:[#allocation2 + $0x518] sm:$0xff]
    %v285 = vld [vmem:[#allocation2 + $0x520] sm:$0xff]
    %v286 = vld [vmem:[#allocation2 + $0x528] sm:$0xff]
    %v287 = vld [vmem:[#allocation2 + $0x530] sm:$0xff]
    %v288 = vld [vmem:[#allocation2 + $0x538] sm:$0xff]
    %v289 = vld [vmem:[#allocation2 + $0x540] sm:$0xff]
    %v290 = vld [vmem:[#allocation2 + $0x548] sm:$0xff]
    %v291 = vld [vmem:[#allocation2 + $0x550] sm:$0xff]
    %v292 = vld [vmem:[#allocation2 + $0x558] sm:$0xff]
    %v293 = vld [vmem:[#allocation2 + $0x560] sm:$0xff]
    %v294 = vld [vmem:[#allocation2 + $0x568] sm:$0xff]
    %v295 = vld [vmem:[#allocation2 + $0x570] sm:$0xff]
    %v296 = vld [vmem:[#allocation2 + $0x578] sm:$0xff]
    %v297 = vld [vmem:[#allocation2 + $0x580] sm:$0xff]
    %v298 = vld [vmem:[#allocation2 + $0x588] sm:$0xff]
    %v299 = vld [vmem:[#allocation2 + $0x590] sm:$0xff]
    %v300 = vld [vmem:[#allocation2 + $0x598] sm:$0xff]
    %v301 = vld [vmem:[#allocation2 + $0x5a0] sm:$0xff]
    %v302 = vld [vmem:[#allocation2 + $0x5a8] sm:$0xff]
    %v303 = vld [vmem:[#allocation2 + $0x5b0] sm:$0xff]
    %v304 = vld [vmem:[#allocation2 + $0x5b8] sm:$0xff]
    %v305 = vld [vmem:[#allocation2 + $0x5c0] sm:$0xff]
    %v306 = vld [vmem:[#allocation2 + $0x5c8] sm:$0xff]
    %v307 = vld [vmem:[#allocation2 + $0x5d0] sm:$0xff]
    %v308 = vld [vmem:[#allocation2 + $0x5d8] sm:$0xff]
    %v309 = vld [vmem:[#allocation2 + $0x5e0] sm:$0xff]
    %v310 = vld [vmem:[#allocation2 + $0x5e8] sm:$0xff]
    %v311 = vld [vmem:[#allocation2 + $0x5f0] sm:$0xff]
    %v312 = vld [vmem:[#allocation2 + $0x5f8] sm:$0xff]
    %v313 = vld [vmem:[#allocation2 + $0x600] sm:$0xff]
    %v314 = vld [vmem:[#allocation2 + $0x608] sm:$0xff]
    %v315 = vld [vmem:[#allocation2 + $0x610] sm:$0xff]
    %v316 = vld [vmem:[#allocation2 + $0x618] sm:$0xff]
    %v317 = vld [vmem:[#allocation2 + $0x620] sm:$0xff]
    %v318 = vld [vmem:[#allocation2 + $0x628] sm:$0xff]
    %v319 = vld [vmem:[#allocation2 + $0x630] sm:$0xff]
    %v320 = vld [vmem:[#allocation2 + $0x638] sm:$0xff]
    %v321 = vld [vmem:[#allocation2 + $0x640] sm:$0xff]
    %v322 = vld [vmem:[#allocation2 + $0x648] sm:$0xff]
    %v323 = vld [vmem:[#allocation2 + $0x650] sm:$0xff]
    %v324 = vld [vmem:[#allocation2 + $0x658] sm:$0xff]
    %v325 = vld [vmem:[#allocation2 + $0x660] sm:$0xff]
    %v326 = vld [vmem:[#allocation2 + $0x668] sm:$0xff]
    %v327 = vld [vmem:[#allocation2 + $0x670] sm:$0xff]
    %v328 = vld [vmem:[#allocation2 + $0x678] sm:$0xff]
    %v329 = vld [vmem:[#allocation2 + $0x680] sm:$0xff]
    %v330 = vld [vmem:[#allocation2 + $0x688] sm:$0xff]
    %v331 = vld [vmem:[#allocation2 + $0x690] sm:$0xff]
    %v332 = vld [vmem:[#allocation2 + $0x698] sm:$0xff]
    %v333 = vld [vmem:[#allocation2 + $0x6a0] sm:$0xff]
    %v334 = vld [vmem:[#allocation2 + $0x6a8] sm:$0xff]
    %v335 = vld [vmem:[#allocation2 + $0x6b0] sm:$0xff]
    %v336 = vld [vmem:[#allocation2 + $0x6b8] sm:$0xff]
    %v337 = vld [vmem:[#allocation2 + $0x6c0] sm:$0xff]
    %v338 = vld [vmem:[#allocation2 + $0x6c8] sm:$0xff]
    %v339 = vld [vmem:[#allocation2 + $0x6d0] sm:$0xff]
    %v340 = vld [vmem:[#allocation2 + $0x6d8] sm:$0xff]
    %v341 = vld [vmem:[#allocation2 + $0x6e0] sm:$0xff]
    %v342 = vld [vmem:[#allocation2 + $0x6e8] sm:$0xff]
    %v343 = vld [vmem:[#allocation2 + $0x6f0] sm:$0xff]
    %v344 = vld [vmem:[#allocation2 + $0x6f8] sm:$0xff]
    %v345 = vld [vmem:[#allocation2 + $0x700] sm:$0xff]
    %v346 = vld [vmem:[#allocation2 + $0x708] sm:$0xff]
    %v347 = vld [vmem:[#allocation2 + $0x710] sm:$0xff]
    %v348 = vld [vmem:[#allocation2 + $0x718] sm:$0xff]
    %v349 = vld [vmem:[#allocation2 + $0x720] sm:$0xff]
    %v350 = vld [vmem:[#allocation2 + $0x728] sm:$0xff]
    %v351 = vld [vmem:[#allocation2 + $0x730] sm:$0xff]
    %v352 = vld [vmem:[#allocation2 + $0x738] sm:$0xff]
    %v353 = vld [vmem:[#allocation2 + $0x740] sm:$0xff]
    %v354 = vld [vmem:[#allocation2 + $0x748] sm:$0xff]
    %v355 = vld [vmem:[#allocation2 + $0x750] sm:$0xff]
    %v356 = vld [vmem:[#allocation2 + $0x758] sm:$0xff]
    %v357 = vld [vmem:[#allocation2 + $0x760] sm:$0xff]
    %v358 = vld [vmem:[#allocation2 + $0x768] sm:$0xff]
    %v359 = vld [vmem:[#allocation2 + $0x770] sm:$0xff]
    %v360 = vld [vmem:[#allocation2 + $0x778] sm:$0xff]
    %v361 = vld [vmem:[#allocation2 + $0x780] sm:$0xff]
    %v362 = vld [vmem:[#allocation2 + $0x788] sm:$0xff]
    %v363 = vld [vmem:[#allocation2 + $0x790] sm:$0xff]
    %v364 = vld [vmem:[#allocation2 + $0x798] sm:$0xff]
    %v365 = vld [vmem:[#allocation2 + $0x7a0] sm:$0xff]
    %v366 = vld [vmem:[#allocation2 + $0x7a8] sm:$0xff]
    %v367 = vld [vmem:[#allocation2 + $0x7b0] sm:$0xff]
    %v368 = vld [vmem:[#allocation2 + $0x7b8] sm:$0xff]
    %v369 = vld [vmem:[#allocation2 + $0x7c0] sm:$0xff]
    %v370 = vld [vmem:[#allocation2 + $0x7c8] sm:$0xff]
    %v371 = vld [vmem:[#allocation2 + $0x7d0] sm:$0xff]
    %v372 = vld [vmem:[#allocation2 + $0x7d8] sm:$0xff]
    %v373 = vld [vmem:[#allocation2 + $0x7e0] sm:$0xff]
    %v374 = vld [vmem:[#allocation2 + $0x7e8] sm:$0xff]
    %v375 = vld [vmem:[#allocation2 + $0x7f0] sm:$0xff]
    %v376 = vld [vmem:[#allocation2 + $0x7f8] sm:$0xff]
    %v377 = vld [vmem:[#allocation2 + $0x800] sm:$0xff]
    %v378 = vld [vmem:[#allocation2 + $0x808] sm:$0xff]
    %v379 = vld [vmem:[#allocation2 + $0x810] sm:$0xff]
    %v380 = vld [vmem:[#allocation2 + $0x818] sm:$0xff]
    %v381 = vld [vmem:[#allocation2 + $0x820] sm:$0xff]
    %v382 = vld [vmem:[#allocation2 + $0x828] sm:$0xff]
    %v383 = vld [vmem:[#allocation2 + $0x830] sm:$0xff]
    %v384 = vld [vmem:[#allocation2 + $0x838] sm:$0xff]
    %v385 = vld [vmem:[#allocation2 + $0x840] sm:$0xff]
    %v386 = vld [vmem:[#allocation2 + $0x848] sm:$0xff]
    %v387 = vld [vmem:[#allocation2 + $0x850] sm:$0xff]
    %v388 = vld [vmem:[#allocation2 + $0x858] sm:$0xff]
    %v389 = vld [vmem:[#allocation2 + $0x860] sm:$0xff]
    %v390 = vld [vmem:[#allocation2 + $0x868] sm:$0xff]
    %v391 = vld [vmem:[#allocation2 + $0x870] sm:$0xff]
    %v392 = vld [vmem:[#allocation2 + $0x878] sm:$0xff]
    %v393 = vld [vmem:[#allocation2 + $0x880] sm:$0xff]
    %v394 = vld [vmem:[#allocation2 + $0x888] sm:$0xff]
    %v395 = vld [vmem:[#allocation2 + $0x890] sm:$0xff]
    %v396 = vld [vmem:[#allocation2 + $0x898] sm:$0xff]
    %v397 = vld [vmem:[#allocation2 + $0x8a0] sm:$0xff]
    %v398 = vld [vmem:[#allocation2 + $0x8a8] sm:$0xff]
    %v399 = vld [vmem:[#allocation2 + $0x8b0] sm:$0xff]
    %v400 = vld [vmem:[#allocation2 + $0x8b8] sm:$0xff]
    %v401 = vld [vmem:[#allocation2 + $0x8c0] sm:$0xff]
    %v402 = vld [vmem:[#allocation2 + $0x8c8] sm:$0xff]
    %v403 = vld [vmem:[#allocation2 + $0x8d0] sm:$0xff]
    %v404 = vld [vmem:[#allocation2 + $0x8d8] sm:$0xff]
    %v405 = vld [vmem:[#allocation2 + $0x8e0] sm:$0xff]
    %v406 = vld [vmem:[#allocation2 + $0x8e8] sm:$0xff]
    %v407 = vld [vmem:[#allocation2 + $0x8f0] sm:$0xff]
    %v408 = vld [vmem:[#allocation2 + $0x8f8] sm:$0xff]
    %v409 = vld [vmem:[#allocation2 + $0x900] sm:$0xff]
    %v410 = vld [vmem:[#allocation2 + $0x908] sm:$0xff]
    %v411 = vld [vmem:[#allocation2 + $0x910] sm:$0xff]
    %v412 = vld [vmem:[#allocation2 + $0x918] sm:$0xff]
    %v413 = vld [vmem:[#allocation2 + $0x920] sm:$0xff]
    %v414 = vld [vmem:[#allocation2 + $0x928] sm:$0xff]
    %v415 = vld [vmem:[#allocation2 + $0x930] sm:$0xff]
    %v416 = vld [vmem:[#allocation2 + $0x938] sm:$0xff]
    %v417 = vld [vmem:[#allocation2 + $0x940] sm:$0xff]
    %v418 = vld [vmem:[#allocation2 + $0x948] sm:$0xff]
    %v419 = vld [vmem:[#allocation2 + $0x950] sm:$0xff]
    %v420 = vld [vmem:[#allocation2 + $0x958] sm:$0xff]
    %v421 = vld [vmem:[#allocation2 + $0x960] sm:$0xff]
    %v422 = vld [vmem:[#allocation2 + $0x968] sm:$0xff]
    %v423 = vld [vmem:[#allocation2 + $0x970] sm:$0xff]
    %v424 = vld [vmem:[#allocation2 + $0x978] sm:$0xff]
    %v425 = vld [vmem:[#allocation4] sm:$0x1]
    %v427 = vlaneseq
    %v428 = vshrl.u32 %v427, 7
    %v429 = vsub.s32 0, %v428
    %v430 = vrot.slane %v425, %v429
    %432 = vmatprep.subr.mxu0 0.0
    %433 = vmatpush1.msra.mxu0 %v121
    %434 = vmatprep.subr.mxu0 0.0
    %435 = vmatpush1.msra.mxu0 %v122
    %436 = vmatprep.subr.mxu0 0.0
    %437 = vmatpush1.msra.mxu0 %v123
    %438 = vmatprep.subr.mxu0 0.0
    %439 = vmatpush1.msra.mxu0 %v124
    %440 = vmatprep.subr.mxu0 0.0
    %441 = vmatpush1.msra.mxu0 %v125
    %442 = vmatprep.subr.mxu0 0.0
    %443 = vmatpush1.msra.mxu0 %v126
    %444 = vmatprep.subr.mxu0 0.0
    %445 = vmatpush1.msra.mxu0 %v127
    %446 = vmatprep.subr.mxu0 0.0
    %447 = vmatpush1.msra.mxu0 %v128
    %448 = vmatprep.subr.mxu0 0.0
    %449 = vmatpush1.msra.mxu0 %v129
    %450 = vmatprep.subr.mxu0 0.0
    %451 = vmatpush1.msra.mxu0 %v130
    %452 = vmatprep.subr.mxu0 0.0
    %453 = vmatpush1.msra.mxu0 %v131
    %454 = vmatprep.subr.mxu0 0.0
    %455 = vmatpush1.msra.mxu0 %v132
    %456 = vmatprep.subr.mxu0 0.0
    %457 = vmatpush1.msra.mxu0 %v133
    %458 = vmatprep.subr.mxu0 0.0
    %459 = vmatpush1.msra.mxu0 %v134
    %460 = vmatprep.subr.mxu0 0.0
    %461 = vmatpush1.msra.mxu0 %v135
    %462 = vmatprep.subr.mxu0 0.0
    %463 = vmatpush1.msra.mxu0 %v136
    %464 = vmatprep.subr.mxu0 0.0
    %465 = vmatpush1.msra.mxu0 %v137
    %466 = vmatprep.subr.mxu0 0.0
    %467 = vmatpush1.msra.mxu0 %v138
    %468 = vmatprep.subr.mxu0 0.0
    %469 = vmatpush1.msra.mxu0 %v139
    %470 = vmatprep.subr.mxu0 0.0
    %471 = vmatpush1.msra.mxu0 %v140
    %472 = vmatprep.subr.mxu0 0.0
    %473 = vmatpush1.msra.mxu0 %v141
    %474 = vmatprep.subr.mxu0 0.0
    %475 = vmatpush1.msra.mxu0 %v142
    %476 = vmatprep.subr.mxu0 0.0
    %477 = vmatpush1.msra.mxu0 %v143
    %478 = vmatprep.subr.mxu0 0.0
    %479 = vmatpush1.msra.mxu0 %v144
    %480 = vmatprep.subr.mxu0 0.0
    %481 = vmatpush1.msra.mxu0 %v145
    %482 = vmatprep.subr.mxu0 0.0
    %483 = vmatpush1.msra.mxu0 %v146
    %484 = vmatprep.subr.mxu0 0.0
    %485 = vmatpush1.msra.mxu0 %v147
    %486 = vmatprep.subr.mxu0 0.0
    %487 = vmatpush1.msra.mxu0 %v148
    %488 = vmatprep.subr.mxu0 0.0
    %489 = vmatpush1.msra.mxu0 %v149
    %490 = vmatprep.subr.mxu0 0.0
    %491 = vmatpush1.msra.mxu0 %v150
    %492 = vmatprep.subr.mxu0 0.0
    %493 = vmatpush1.msra.mxu0 %v151
    %494 = vmatprep.subr.mxu0 0.0
    %495 = vmatpush1.msra.mxu0 %v152
    %496 = vmatprep.mubr.f32.mxu0 %v103
    %497 = vmatmul.mubr.f32.gmra.mrb[0].mxu0 %v102
    %v498 = vpop.f32.mrb[0].mxu0
    %v499 = vadd.f32 %v430, %v498
    %v500 = vpop.f32.mrb[0].mxu0
    %501 = vdwg.mxu0
    %502 = vmatprep.subr.mxu0 0.0
    %503 = vmatpush1.msra.mxu0 %v153
    %504 = vmatprep.subr.mxu0 0.0
    %505 = vmatpush1.msra.mxu0 %v154
    %506 = vmatprep.subr.mxu0 0.0
    %507 = vmatpush1.msra.mxu0 %v155
    %508 = vmatprep.subr.mxu0 0.0
    %509 = vmatpush1.msra.mxu0 %v156
    %510 = vmatprep.subr.mxu0 0.0
    %511 = vmatpush1.msra.mxu0 %v157
    %512 = vmatprep.subr.mxu0 0.0
    %513 = vmatpush1.msra.mxu0 %v158
    %514 = vmatprep.subr.mxu0 0.0
    %515 = vmatpush1.msra.mxu0 %v159
    %516 = vmatprep.subr.mxu0 0.0
    %517 = vmatpush1.msra.mxu0 %v160
    %518 = vmatprep.subr.mxu0 0.0
    %519 = vmatpush1.msra.mxu0 %v161
    %520 = vmatprep.subr.mxu0 0.0
    %521 = vmatpush1.msra.mxu0 %v162
    %522 = vmatprep.subr.mxu0 0.0
    %523 = vmatpush1.msra.mxu0 %v163
    %524 = vmatprep.subr.mxu0 0.0
    %525 = vmatpush1.msra.mxu0 %v164
    %526 = vmatprep.subr.mxu0 0.0
    %527 = vmatpush1.msra.mxu0 %v165
    %528 = vmatprep.subr.mxu0 0.0
    %529 = vmatpush1.msra.mxu0 %v166
    %530 = vmatprep.subr.mxu0 0.0
    %531 = vmatpush1.msra.mxu0 %v167
    %532 = vmatprep.subr.mxu0 0.0
    %533 = vmatpush1.msra.mxu0 %v168
    %534 = vmatprep.subr.mxu0 0.0
    %535 = vmatpush1.msra.mxu0 %v169
    %536 = vmatprep.subr.mxu0 0.0
    %537 = vmatpush1.msra.mxu0 %v170
    %538 = vmatprep.subr.mxu0 0.0
    %539 = vmatpush1.msra.mxu0 %v171
    %540 = vmatprep.subr.mxu0 0.0
    %541 = vmatpush1.msra.mxu0 %v172
    %542 = vmatprep.subr.mxu0 0.0
    %543 = vmatpush1.msra.mxu0 %v173
    %544 = vmatprep.subr.mxu0 0.0
    %545 = vmatpush1.msra.mxu0 %v174
    %546 = vmatprep.subr.mxu0 0.0
    %547 = vmatpush1.msra.mxu0 %v175
    %548 = vmatprep.subr.mxu0 0.0
    %549 = vmatpush1.msra.mxu0 %v176
    %550 = vmatprep.subr.mxu0 0.0
    %551 = vmatpush1.msra.mxu0 %v177
    %552 = vmatprep.subr.mxu0 0.0
    %553 = vmatpush1.msra.mxu0 %v178
    %554 = vmatprep.subr.mxu0 0.0
    %555 = vmatpush1.msra.mxu0 %v179
    %556 = vmatprep.subr.mxu0 0.0
    %557 = vmatpush1.msra.mxu0 %v180
    %558 = vmatprep.subr.mxu0 0.0
    %559 = vmatpush1.msra.mxu0 %v181
    %560 = vmatprep.subr.mxu0 0.0
    %561 = vmatpush1.msra.mxu0 %v182
    %562 = vmatprep.subr.mxu0 0.0
    %563 = vmatpush1.msra.mxu0 %v183
    %564 = vmatprep.subr.mxu0 0.0
    %565 = vmatpush1.msra.mxu0 %v184
    %566 = vmatprep.mubr.f32.mxu0 %v105
    %567 = vmatmul.mubr.f32.gmra.mrb[0].mxu0 %v104
    %v568 = vpop.f32.mrb[0].mxu0
    %v569 = vadd.f32 %v499, %v568
    %v570 = vpop.f32.mrb[0].mxu0
    %571 = vdwg.mxu0
    %572 = vmatprep.subr.mxu0 0.0
    %573 = vmatpush1.msra.mxu0 %v185
    %574 = vmatprep.subr.mxu0 0.0
    %575 = vmatpush1.msra.mxu0 %v186
    %576 = vmatprep.subr.mxu0 0.0
    %577 = vmatpush1.msra.mxu0 %v187
    %578 = vmatprep.subr.mxu0 0.0
    %579 = vmatpush1.msra.mxu0 %v188
    %580 = vmatprep.subr.mxu0 0.0
    %581 = vmatpush1.msra.mxu0 %v189
    %582 = vmatprep.subr.mxu0 0.0
    %583 = vmatpush1.msra.mxu0 %v190
    %584 = vmatprep.subr.mxu0 0.0
    %585 = vmatpush1.msra.mxu0 %v191
    %586 = vmatprep.subr.mxu0 0.0
    %587 = vmatpush1.msra.mxu0 %v192
    %588 = vmatprep.subr.mxu0 0.0
    %589 = vmatpush1.msra.mxu0 %v193
    %590 = vmatprep.subr.mxu0 0.0
    %591 = vmatpush1.msra.mxu0 %v194
    %592 = vmatprep.subr.mxu0 0.0
    %593 = vmatpush1.msra.mxu0 %v195
    %594 = vmatprep.subr.mxu0 0.0
    %595 = vmatpush1.msra.mxu0 %v196
    %596 = vmatprep.subr.mxu0 0.0
    %597 = vmatpush1.msra.mxu0 %v197
    %598 = vmatprep.subr.mxu0 0.0
    %599 = vmatpush1.msra.mxu0 %v198
    %600 = vmatprep.subr.mxu0 0.0
    %601 = vmatpush1.msra.mxu0 %v199
    %602 = vmatprep.subr.mxu0 0.0
    %603 = vmatpush1.msra.mxu0 %v200
    %604 = vmatprep.subr.mxu0 0.0
    %605 = vmatpush1.msra.mxu0 %v201
    %606 = vmatprep.subr.mxu0 0.0
    %607 = vmatpush1.msra.mxu0 %v202
    %608 = vmatprep.subr.mxu0 0.0
    %609 = vmatpush1.msra.mxu0 %v203
    %610 = vmatprep.subr.mxu0 0.0
    %611 = vmatpush1.msra.mxu0 %v204
    %612 = vmatprep.subr.mxu0 0.0
    %613 = vmatpush1.msra.mxu0 %v205
    %614 = vmatprep.subr.mxu0 0.0
    %615 = vmatpush1.msra.mxu0 %v206
    %616 = vmatprep.subr.mxu0 0.0
    %617 = vmatpush1.msra.mxu0 %v207
    %618 = vmatprep.subr.mxu0 0.0
    %619 = vmatpush1.msra.mxu0 %v208
    %620 = vmatprep.subr.mxu0 0.0
    %621 = vmatpush1.msra.mxu0 %v209
    %622 = vmatprep.subr.mxu0 0.0
    %623 = vmatpush1.msra.mxu0 %v210
    %624 = vmatprep.subr.mxu0 0.0
    %625 = vmatpush1.msra.mxu0 %v211
    %626 = vmatprep.subr.mxu0 0.0
    %627 = vmatpush1.msra.mxu0 %v212
    %628 = vmatprep.subr.mxu0 0.0
    %629 = vmatpush1.msra.mxu0 %v213
    %630 = vmatprep.subr.mxu0 0.0
    %631 = vmatpush1.msra.mxu0 %v214
    %632 = vmatprep.subr.mxu0 0.0
    %633 = vmatpush1.msra.mxu0 %v215
    %634 = vmatprep.subr.mxu0 0.0
    %635 = vmatpush1.msra.mxu0 %v216
    %636 = vmatprep.mubr.f32.mxu0 %v107
    %637 = vmatmul.mubr.f32.gmra.mrb[0].mxu0 %v106
    %v638 = vpop.f32.mrb[0].mxu0
    %v639 = vadd.f32 %v569, %v638
    %v640 = vpop.f32.mrb[0].mxu0
    %641 = vdwg.mxu0
    %642 = vmatprep.subr.mxu0 0.0
    %643 = vmatpush1.msra.mxu0 %v217
    %644 = vmatprep.subr.mxu0 0.0
    %645 = vmatpush1.msra.mxu0 %v218
    %646 = vmatprep.subr.mxu0 0.0
    %647 = vmatpush1.msra.mxu0 %v219
    %648 = vmatprep.subr.mxu0 0.0
    %649 = vmatpush1.msra.mxu0 %v220
    %650 = vmatprep.subr.mxu0 0.0
    %651 = vmatpush1.msra.mxu0 %v221
    %652 = vmatprep.subr.mxu0 0.0
    %653 = vmatpush1.msra.mxu0 %v222
    %654 = vmatprep.subr.mxu0 0.0
    %655 = vmatpush1.msra.mxu0 %v223
    %656 = vmatprep.subr.mxu0 0.0
    %657 = vmatpush1.msra.mxu0 %v224
    %658 = vmatprep.subr.mxu0 0.0
    %659 = vmatpush1.msra.mxu0 %v225
    %660 = vmatprep.subr.mxu0 0.0
    %661 = vmatpush1.msra.mxu0 %v226
    %662 = vmatprep.subr.mxu0 0.0
    %663 = vmatpush1.msra.mxu0 %v227
    %664 = vmatprep.subr.mxu0 0.0
    %665 = vmatpush1.msra.mxu0 %v228
    %666 = vmatprep.subr.mxu0 0.0
    %667 = vmatpush1.msra.mxu0 %v229
    %668 = vmatprep.subr.mxu0 0.0
    %669 = vmatpush1.msra.mxu0 %v230
    %670 = vmatprep.subr.mxu0 0.0
    %671 = vmatpush1.msra.mxu0 %v231
    %672 = vmatprep.subr.mxu0 0.0
    %673 = vmatpush1.msra.mxu0 %v232
    %674 = vmatprep.subr.mxu0 0.0
    %675 = vmatpush1.msra.mxu0 %v233
    %676 = vmatprep.subr.mxu0 0.0
    %677 = vmatpush1.msra.mxu0 %v234
    %678 = vmatprep.subr.mxu0 0.0
    %679 = vmatpush1.msra.mxu0 %v235
    %680 = vmatprep.subr.mxu0 0.0
    %681 = vmatpush1.msra.mxu0 %v236
    %682 = vmatprep.subr.mxu0 0.0
    %683 = vmatpush1.msra.mxu0 %v237
    %684 = vmatprep.subr.mxu0 0.0
    %685 = vmatpush1.msra.mxu0 %v238
    %686 = vmatprep.subr.mxu0 0.0
    %687 = vmatpush1.msra.mxu0 %v239
    %688 = vmatprep.subr.mxu0 0.0
    %689 = vmatpush1.msra.mxu0 %v240
    %690 = vmatprep.subr.mxu0 0.0
    %691 = vmatpush1.msra.mxu0 %v241
    %692 = vmatprep.subr.mxu0 0.0
    %693 = vmatpush1.msra.mxu0 %v242
    %694 = vmatprep.subr.mxu0 0.0
    %695 = vmatpush1.msra.mxu0 %v243
    %696 = vmatprep.subr.mxu0 0.0
    %697 = vmatpush1.msra.mxu0 %v244
    %698 = vmatprep.subr.mxu0 0.0
    %699 = vmatpush1.msra.mxu0 %v245
    %700 = vmatprep.subr.mxu0 0.0
    %701 = vmatpush1.msra.mxu0 %v246
    %702 = vmatprep.subr.mxu0 0.0
    %703 = vmatpush1.msra.mxu0 %v247
    %704 = vmatprep.subr.mxu0 0.0
    %705 = vmatpush1.msra.mxu0 %v248
    %706 = vmatprep.mubr.f32.mxu0 %v109
    %707 = vmatmul.mubr.f32.gmra.mrb[0].mxu0 %v108
    %v708 = vpop.f32.mrb[0].mxu0
    %v709 = vadd.f32 %v639, %v708
    %v710 = vpop.f32.mrb[0].mxu0
    %711 = vdwg.mxu0
    %712 = vmatprep.subr.mxu0 0.0
    %713 = vmatpush1.msra.mxu0 %v249
    %714 = vmatprep.subr.mxu0 0.0
    %715 = vmatpush1.msra.mxu0 %v250
    %716 = vmatprep.subr.mxu0 0.0
    %717 = vmatpush1.msra.mxu0 %v251
    %718 = vmatprep.subr.mxu0 0.0
    %719 = vmatpush1.msra.mxu0 %v252
    %720 = vmatprep.subr.mxu0 0.0
    %721 = vmatpush1.msra.mxu0 %v253
    %722 = vmatprep.subr.mxu0 0.0
    %723 = vmatpush1.msra.mxu0 %v254
    %724 = vmatprep.subr.mxu0 0.0
    %725 = vmatpush1.msra.mxu0 %v255
    %726 = vmatprep.subr.mxu0 0.0
    %727 = vmatpush1.msra.mxu0 %v256
    %728 = vmatprep.subr.mxu0 0.0
    %729 = vmatpush1.msra.mxu0 %v257
    %730 = vmatprep.subr.mxu0 0.0
    %731 = vmatpush1.msra.mxu0 %v258
    %732 = vmatprep.subr.mxu0 0.0
    %733 = vmatpush1.msra.mxu0 %v259
    %734 = vmatprep.subr.mxu0 0.0
    %735 = vmatpush1.msra.mxu0 %v260
    %736 = vmatprep.subr.mxu0 0.0
    %737 = vmatpush1.msra.mxu0 %v261
    %738 = vmatprep.subr.mxu0 0.0
    %739 = vmatpush1.msra.mxu0 %v262
    %740 = vmatprep.subr.mxu0 0.0
    %741 = vmatpush1.msra.mxu0 %v263
    %742 = vmatprep.subr.mxu0 0.0
    %743 = vmatpush1.msra.mxu0 %v264
    %744 = vmatprep.subr.mxu0 0.0
    %745 = vmatpush1.msra.mxu0 %v265
    %746 = vmatprep.subr.mxu0 0.0
    %747 = vmatpush1.msra.mxu0 %v266
    %748 = vmatprep.subr.mxu0 0.0
    %749 = vmatpush1.msra.mxu0 %v267
    %750 = vmatprep.subr.mxu0 0.0
    %751 = vmatpush1.msra.mxu0 %v268
    %752 = vmatprep.subr.mxu0 0.0
    %753 = vmatpush1.msra.mxu0 %v269
    %754 = vmatprep.subr.mxu0 0.0
    %755 = vmatpush1.msra.mxu0 %v270
    %756 = vmatprep.subr.mxu0 0.0
    %757 = vmatpush1.msra.mxu0 %v271
    %758 = vmatprep.subr.mxu0 0.0
    %759 = vmatpush1.msra.mxu0 %v272
    %760 = vmatprep.subr.mxu0 0.0
    %761 = vmatpush1.msra.mxu0 %v273
    %762 = vmatprep.subr.mxu0 0.0
    %763 = vmatpush1.msra.mxu0 %v274
    %764 = vmatprep.subr.mxu0 0.0
    %765 = vmatpush1.msra.mxu0 %v275
    %766 = vmatprep.subr.mxu0 0.0
    %767 = vmatpush1.msra.mxu0 %v276
    %768 = vmatprep.subr.mxu0 0.0
    %769 = vmatpush1.msra.mxu0 %v277
    %770 = vmatprep.subr.mxu0 0.0
    %771 = vmatpush1.msra.mxu0 %v278
    %772 = vmatprep.subr.mxu0 0.0
    %773 = vmatpush1.msra.mxu0 %v279
    %774 = vmatprep.subr.mxu0 0.0
    %775 = vmatpush1.msra.mxu0 %v280
    %776 = vmatprep.mubr.f32.mxu0 %v111
    %777 = vmatmul.mubr.f32.gmra.mrb[0].mxu0 %v110
    %v778 = vpop.f32.mrb[0].mxu0
    %v779 = vadd.f32 %v709, %v778
    %v780 = vpop.f32.mrb[0].mxu0
    %781 = vdwg.mxu0
    %782 = vmatprep.subr.mxu0 0.0
    %783 = vmatpush1.msra.mxu0 %v281
    %784 = vmatprep.subr.mxu0 0.0
    %785 = vmatpush1.msra.mxu0 %v282
    %786 = vmatprep.subr.mxu0 0.0
    %787 = vmatpush1.msra.mxu0 %v283
    %788 = vmatprep.subr.mxu0 0.0
    %789 = vmatpush1.msra.mxu0 %v284
    %790 = vmatprep.subr.mxu0 0.0
    %791 = vmatpush1.msra.mxu0 %v285
    %792 = vmatprep.subr.mxu0 0.0
    %793 = vmatpush1.msra.mxu0 %v286
    %794 = vmatprep.subr.mxu0 0.0
    %795 = vmatpush1.msra.mxu0 %v287
    %796 = vmatprep.subr.mxu0 0.0
    %797 = vmatpush1.msra.mxu0 %v288
    %798 = vmatprep.subr.mxu0 0.0
    %799 = vmatpush1.msra.mxu0 %v289
    %800 = vmatprep.subr.mxu0 0.0
    %801 = vmatpush1.msra.mxu0 %v290
    %802 = vmatprep.subr.mxu0 0.0
    %803 = vmatpush1.msra.mxu0 %v291
    %804 = vmatprep.subr.mxu0 0.0
    %805 = vmatpush1.msra.mxu0 %v292
    %806 = vmatprep.subr.mxu0 0.0
    %807 = vmatpush1.msra.mxu0 %v293
    %808 = vmatprep.subr.mxu0 0.0
    %809 = vmatpush1.msra.mxu0 %v294
    %810 = vmatprep.subr.mxu0 0.0
    %811 = vmatpush1.msra.mxu0 %v295
    %812 = vmatprep.subr.mxu0 0.0
    %813 = vmatpush1.msra.mxu0 %v296
    %814 = vmatprep.subr.mxu0 0.0
    %815 = vmatpush1.msra.mxu0 %v297
    %816 = vmatprep.subr.mxu0 0.0
    %817 = vmatpush1.msra.mxu0 %v298
    %818 = vmatprep.subr.mxu0 0.0
    %819 = vmatpush1.msra.mxu0 %v299
    %820 = vmatprep.subr.mxu0 0.0
    %821 = vmatpush1.msra.mxu0 %v300
    %822 = vmatprep.subr.mxu0 0.0
    %823 = vmatpush1.msra.mxu0 %v301
    %824 = vmatprep.subr.mxu0 0.0
    %825 = vmatpush1.msra.mxu0 %v302
    %826 = vmatprep.subr.mxu0 0.0
    %827 = vmatpush1.msra.mxu0 %v303
    %828 = vmatprep.subr.mxu0 0.0
    %829 = vmatpush1.msra.mxu0 %v304
    %830 = vmatprep.subr.mxu0 0.0
    %831 = vmatpush1.msra.mxu0 %v305
    %832 = vmatprep.subr.mxu0 0.0
    %833 = vmatpush1.msra.mxu0 %v306
    %834 = vmatprep.subr.mxu0 0.0
    %835 = vmatpush1.msra.mxu0 %v307
    %836 = vmatprep.subr.mxu0 0.0
    %837 = vmatpush1.msra.mxu0 %v308
    %838 = vmatprep.subr.mxu0 0.0
    %839 = vmatpush1.msra.mxu0 %v309
    %840 = vmatprep.subr.mxu0 0.0
    %841 = vmatpush1.msra.mxu0 %v310
    %842 = vmatprep.subr.mxu0 0.0
    %843 = vmatpush1.msra.mxu0 %v311
    %844 = vmatprep.subr.mxu0 0.0
    %845 = vmatpush1.msra.mxu0 %v312
    %846 = vmatprep.mubr.f32.mxu0 %v113
    %847 = vmatmul.mubr.f32.gmra.mrb[0].mxu0 %v112
    %v848 = vpop.f32.mrb[0].mxu0
    %v849 = vadd.f32 %v779, %v848
    %v850 = vpop.f32.mrb[0].mxu0
    %851 = vdwg.mxu0
    %852 = vmatprep.subr.mxu0 0.0
    %853 = vmatpush1.msra.mxu0 %v313
    %854 = vmatprep.subr.mxu0 0.0
    %855 = vmatpush1.msra.mxu0 %v314
    %856 = vmatprep.subr.mxu0 0.0
    %857 = vmatpush1.msra.mxu0 %v315
    %858 = vmatprep.subr.mxu0 0.0
    %859 = vmatpush1.msra.mxu0 %v316
    %860 = vmatprep.subr.mxu0 0.0
    %861 = vmatpush1.msra.mxu0 %v317
    %862 = vmatprep.subr.mxu0 0.0
    %863 = vmatpush1.msra.mxu0 %v318
    %864 = vmatprep.subr.mxu0 0.0
    %865 = vmatpush1.msra.mxu0 %v319
    %866 = vmatprep.subr.mxu0 0.0
    %867 = vmatpush1.msra.mxu0 %v320
    %868 = vmatprep.subr.mxu0 0.0
    %869 = vmatpush1.msra.mxu0 %v321
    %870 = vmatprep.subr.mxu0 0.0
    %871 = vmatpush1.msra.mxu0 %v322
    %872 = vmatprep.subr.mxu0 0.0
    %873 = vmatpush1.msra.mxu0 %v323
    %874 = vmatprep.subr.mxu0 0.0
    %875 = vmatpush1.msra.mxu0 %v324
    %876 = vmatprep.subr.mxu0 0.0
    %877 = vmatpush1.msra.mxu0 %v325
    %878 = vmatprep.subr.mxu0 0.0
    %879 = vmatpush1.msra.mxu0 %v326
    %880 = vmatprep.subr.mxu0 0.0
    %881 = vmatpush1.msra.mxu0 %v327
    %882 = vmatprep.subr.mxu0 0.0
    %883 = vmatpush1.msra.mxu0 %v328
    %884 = vmatprep.subr.mxu0 0.0
    %885 = vmatpush1.msra.mxu0 %v329
    %886 = vmatprep.subr.mxu0 0.0
    %887 = vmatpush1.msra.mxu0 %v330
    %888 = vmatprep.subr.mxu0 0.0
    %889 = vmatpush1.msra.mxu0 %v331
    %890 = vmatprep.subr.mxu0 0.0
    %891 = vmatpush1.msra.mxu0 %v332
    %892 = vmatprep.subr.mxu0 0.0
    %893 = vmatpush1.msra.mxu0 %v333
    %894 = vmatprep.subr.mxu0 0.0
    %895 = vmatpush1.msra.mxu0 %v334
    %896 = vmatprep.subr.mxu0 0.0
    %897 = vmatpush1.msra.mxu0 %v335
    %898 = vmatprep.subr.mxu0 0.0
    %899 = vmatpush1.msra.mxu0 %v336
    %900 = vmatprep.subr.mxu0 0.0
    %901 = vmatpush1.msra.mxu0 %v337
    %902 = vmatprep.subr.mxu0 0.0
    %903 = vmatpush1.msra.mxu0 %v338
    %904 = vmatprep.subr.mxu0 0.0
    %905 = vmatpush1.msra.mxu0 %v339
    %906 = vmatprep.subr.mxu0 0.0
    %907 = vmatpush1.msra.mxu0 %v340
    %908 = vmatprep.subr.mxu0 0.0
    %909 = vmatpush1.msra.mxu0 %v341
    %910 = vmatprep.subr.mxu0 0.0
    %911 = vmatpush1.msra.mxu0 %v342
    %912 = vmatprep.subr.mxu0 0.0
    %913 = vmatpush1.msra.mxu0 %v343
    %914 = vmatprep.subr.mxu0 0.0
    %915 = vmatpush1.msra.mxu0 %v344
    %916 = vmatprep.mubr.f32.mxu0 %v115
    %917 = vmatmul.mubr.f32.gmra.mrb[0].mxu0 %v114
    %v918 = vpop.f32.mrb[0].mxu0
    %v919 = vadd.f32 %v849, %v918
    %v920 = vpop.f32.mrb[0].mxu0
    %921 = vdwg.mxu0
    %922 = vmatprep.subr.mxu0 0.0
    %923 = vmatpush1.msra.mxu0 %v345
    %924 = vmatprep.subr.mxu0 0.0
    %925 = vmatpush1.msra.mxu0 %v346
    %926 = vmatprep.subr.mxu0 0.0
    %927 = vmatpush1.msra.mxu0 %v347
    %928 = vmatprep.subr.mxu0 0.0
    %929 = vmatpush1.msra.mxu0 %v348
    %930 = vmatprep.subr.mxu0 0.0
    %931 = vmatpush1.msra.mxu0 %v349
    %932 = vmatprep.subr.mxu0 0.0
    %933 = vmatpush1.msra.mxu0 %v350
    %934 = vmatprep.subr.mxu0 0.0
    %935 = vmatpush1.msra.mxu0 %v351
    %936 = vmatprep.subr.mxu0 0.0
    %937 = vmatpush1.msra.mxu0 %v352
    %938 = vmatprep.subr.mxu0 0.0
    %939 = vmatpush1.msra.mxu0 %v353
    %940 = vmatprep.subr.mxu0 0.0
    %941 = vmatpush1.msra.mxu0 %v354
    %942 = vmatprep.subr.mxu0 0.0
    %943 = vmatpush1.msra.mxu0 %v355
    %944 = vmatprep.subr.mxu0 0.0
    %945 = vmatpush1.msra.mxu0 %v356
    %946 = vmatprep.subr.mxu0 0.0
    %947 = vmatpush1.msra.mxu0 %v357
    %948 = vmatprep.subr.mxu0 0.0
    %949 = vmatpush1.msra.mxu0 %v358
    %950 = vmatprep.subr.mxu0 0.0
    %951 = vmatpush1.msra.mxu0 %v359
    %952 = vmatprep.subr.mxu0 0.0
    %953 = vmatpush1.msra.mxu0 %v360
    %954 = vmatprep.subr.mxu0 0.0
    %955 = vmatpush1.msra.mxu0 %v361
    %956 = vmatprep.subr.mxu0 0.0
    %957 = vmatpush1.msra.mxu0 %v362
    %958 = vmatprep.subr.mxu0 0.0
    %959 = vmatpush1.msra.mxu0 %v363
    %960 = vmatprep.subr.mxu0 0.0
    %961 = vmatpush1.msra.mxu0 %v364
    %962 = vmatprep.subr.mxu0 0.0
    %963 = vmatpush1.msra.mxu0 %v365
    %964 = vmatprep.subr.mxu0 0.0
    %965 = vmatpush1.msra.mxu0 %v366
    %966 = vmatprep.subr.mxu0 0.0
    %967 = vmatpush1.msra.mxu0 %v367
    %968 = vmatprep.subr.mxu0 0.0
    %969 = vmatpush1.msra.mxu0 %v368
    %970 = vmatprep.subr.mxu0 0.0
    %971 = vmatpush1.msra.mxu0 %v369
    %972 = vmatprep.subr.mxu0 0.0
    %973 = vmatpush1.msra.mxu0 %v370
    %974 = vmatprep.subr.mxu0 0.0
    %975 = vmatpush1.msra.mxu0 %v371
    %976 = vmatprep.subr.mxu0 0.0
    %977 = vmatpush1.msra.mxu0 %v372
    %978 = vmatprep.subr.mxu0 0.0
    %979 = vmatpush1.msra.mxu0 %v373
    %980 = vmatprep.subr.mxu0 0.0
    %981 = vmatpush1.msra.mxu0 %v374
    %982 = vmatprep.subr.mxu0 0.0
    %983 = vmatpush1.msra.mxu0 %v375
    %984 = vmatprep.subr.mxu0 0.0
    %985 = vmatpush1.msra.mxu0 %v376
    %986 = vmatprep.mubr.f32.mxu0 %v117
    %987 = vmatmul.mubr.f32.gmra.mrb[0].mxu0 %v116
    %v988 = vpop.f32.mrb[0].mxu0
    %v989 = vadd.f32 %v919, %v988
    %v990 = vpop.f32.mrb[0].mxu0
    %991 = vdwg.mxu0
    %992 = vmatprep.subr.mxu0 0.0
    %993 = vmatpush1.msra.mxu0 %v377
    %994 = vmatprep.subr.mxu0 0.0
    %995 = vmatpush1.msra.mxu0 %v378
    %996 = vmatprep.subr.mxu0 0.0
    %997 = vmatpush1.msra.mxu0 %v379
    %998 = vmatprep.subr.mxu0 0.0
    %999 = vmatpush1.msra.mxu0 %v380
    %1000 = vmatprep.subr.mxu0 0.0
    %1001 = vmatpush1.msra.mxu0 %v381
    %1002 = vmatprep.subr.mxu0 0.0
    %1003 = vmatpush1.msra.mxu0 %v382
    %1004 = vmatprep.subr.mxu0 0.0
    %1005 = vmatpush1.msra.mxu0 %v383
    %1006 = vmatprep.subr.mxu0 0.0
    %1007 = vmatpush1.msra.mxu0 %v384
    %1008 = vmatprep.subr.mxu0 0.0
    %1009 = vmatpush1.msra.mxu0 %v385
    %1010 = vmatprep.subr.mxu0 0.0
    %1011 = vmatpush1.msra.mxu0 %v386
    %1012 = vmatprep.subr.mxu0 0.0
    %1013 = vmatpush1.msra.mxu0 %v387
    %1014 = vmatprep.subr.mxu0 0.0
    %1015 = vmatpush1.msra.mxu0 %v388
    %1016 = vmatprep.subr.mxu0 0.0
    %1017 = vmatpush1.msra.mxu0 %v389
    %1018 = vmatprep.subr.mxu0 0.0
    %1019 = vmatpush1.msra.mxu0 %v390
    %1020 = vmatprep.subr.mxu0 0.0
    %1021 = vmatpush1.msra.mxu0 %v391
    %1022 = vmatprep.subr.mxu0 0.0
    %1023 = vmatpush1.msra.mxu0 %v392
    %1024 = vmatprep.subr.mxu0 0.0
    %1025 = vmatpush1.msra.mxu0 %v393
    %1026 = vmatprep.subr.mxu0 0.0
    %1027 = vmatpush1.msra.mxu0 %v394
    %1028 = vmatprep.subr.mxu0 0.0
    %1029 = vmatpush1.msra.mxu0 %v395
    %1030 = vmatprep.subr.mxu0 0.0
    %1031 = vmatpush1.msra.mxu0 %v396
    %1032 = vmatprep.subr.mxu0 0.0
    %1033 = vmatpush1.msra.mxu0 %v397
    %1034 = vmatprep.subr.mxu0 0.0
    %1035 = vmatpush1.msra.mxu0 %v398
    %1036 = vmatprep.subr.mxu0 0.0
    %1037 = vmatpush1.msra.mxu0 %v399
    %1038 = vmatprep.subr.mxu0 0.0
    %1039 = vmatpush1.msra.mxu0 %v400
    %1040 = vmatprep.subr.mxu0 0.0
    %1041 = vmatpush1.msra.mxu0 %v401
    %1042 = vmatprep.subr.mxu0 0.0
    %1043 = vmatpush1.msra.mxu0 %v402
    %1044 = vmatprep.subr.mxu0 0.0
    %1045 = vmatpush1.msra.mxu0 %v403
    %1046 = vmatprep.subr.mxu0 0.0
    %1047 = vmatpush1.msra.mxu0 %v404
    %1048 = vmatprep.subr.mxu0 0.0
    %1049 = vmatpush1.msra.mxu0 %v405
    %1050 = vmatprep.subr.mxu0 0.0
    %1051 = vmatpush1.msra.mxu0 %v406
    %1052 = vmatprep.subr.mxu0 0.0
    %1053 = vmatpush1.msra.mxu0 %v407
    %1054 = vmatprep.subr.mxu0 0.0
    %1055 = vmatpush1.msra.mxu0 %v408
    %1056 = vmatprep.mubr.f32.mxu0 %v119
    %1057 = vmatmul.mubr.f32.gmra.mrb[0].mxu0 %v118
    %v1058 = vpop.f32.mrb[0].mxu0
    %v1059 = vadd.f32 %v989, %v1058
    %v1060 = vpop.f32.mrb[0].mxu0
    %1061 = vdwg.mxu0
    %1062 = vmatprep.subr.mxu0 0.0
    %1063 = vmatpush1.msra.mxu0 %v409
    %1064 = vmatprep.subr.mxu0 0.0
    %1065 = vmatpush1.msra.mxu0 %v410
    %1066 = vmatprep.subr.mxu0 0.0
    %1067 = vmatpush1.msra.mxu0 %v411
    %1068 = vmatprep.subr.mxu0 0.0
    %1069 = vmatpush1.msra.mxu0 %v412
    %1070 = vmatprep.subr.mxu0 0.0
    %1071 = vmatpush1.msra.mxu0 %v413
    %1072 = vmatprep.subr.mxu0 0.0
    %1073 = vmatpush1.msra.mxu0 %v414
    %1074 = vmatprep.subr.mxu0 0.0
    %1075 = vmatpush1.msra.mxu0 %v415
    %1076 = vmatprep.subr.mxu0 0.0
    %1077 = vmatpush1.msra.mxu0 %v416
    %1078 = vmatprep.subr.mxu0 0.0
    %1079 = vmatpush1.msra.mxu0 %v417
    %1080 = vmatprep.subr.mxu0 0.0
    %1081 = vmatpush1.msra.mxu0 %v418
    %1082 = vmatprep.subr.mxu0 0.0
    %1083 = vmatpush1.msra.mxu0 %v419
    %1084 = vmatprep.subr.mxu0 0.0
    %1085 = vmatpush1.msra.mxu0 %v420
    %1086 = vmatprep.subr.mxu0 0.0
    %1087 = vmatpush1.msra.mxu0 %v421
    %1088 = vmatprep.subr.mxu0 0.0
    %1089 = vmatpush1.msra.mxu0 %v422
    %1090 = vmatprep.subr.mxu0 0.0
    %1091 = vmatpush1.msra.mxu0 %v423
    %1092 = vmatprep.subr.mxu0 0.0
    %1093 = vmatpush1.msra.mxu0 %v424
    %1094 = vmatprep.subr.mxu0 0.0
    %1095 = vmatpush1.msra.mxu0 0.0
    %1096 = vmatprep.subr.mxu0 0.0
    %1097 = vmatpush1.msra.mxu0 0.0
    %1098 = vmatprep.subr.mxu0 0.0
    %1099 = vmatpush1.msra.mxu0 0.0
    %1100 = vmatprep.subr.mxu0 0.0
    %1101 = vmatpush1.msra.mxu0 0.0
    %1102 = vmatprep.subr.mxu0 0.0
    %1103 = vmatpush1.msra.mxu0 0.0
    %1104 = vmatprep.subr.mxu0 0.0
    %1105 = vmatpush1.msra.mxu0 0.0
    %1106 = vmatprep.subr.mxu0 0.0
    %1107 = vmatpush1.msra.mxu0 0.0
    %1108 = vmatprep.subr.mxu0 0.0
    %1109 = vmatpush1.msra.mxu0 0.0
    %1110 = vmatprep.subr.mxu0 0.0
    %1111 = vmatpush1.msra.mxu0 0.0
    %1112 = vmatprep.subr.mxu0 0.0
    %1113 = vmatpush1.msra.mxu0 0.0
    %1114 = vmatprep.subr.mxu0 0.0
    %1115 = vmatpush1.msra.mxu0 0.0
    %1116 = vmatprep.subr.mxu0 0.0
    %1117 = vmatpush1.msra.mxu0 0.0
    %1118 = vmatprep.subr.mxu0 0.0
    %1119 = vmatpush1.msra.mxu0 0.0
    %1120 = vmatprep.subr.mxu0 0.0
    %1121 = vmatpush1.msra.mxu0 0.0
    %1122 = vmatprep.subr.mxu0 0.0
    %1123 = vmatpush1.msra.mxu0 0.0
    %1124 = vmatprep.subr.mxu0 0.0
    %1125 = vmatpush1.msra.mxu0 0.0
    %1126 = vmatprep.mubr.f32.mxu0 0.0
    %1127 = vmatmul.mubr.f32.gmra.mrb[0].mxu0 %v120
    %v1128 = vpop.f32.mrb[0].mxu0
    %v1129 = vadd.f32 %v1059, %v1128
    %v1130 = vpop.f32.mrb[0].mxu0
    %1131 = vdwg.mxu0
    %v1132 = vmax.f32 %v1129, 0.0
    %v1133 = vld [vmem:[#allocation6] sm:$0xff]
    %v1134 = vld [vmem:[#allocation6 + $0x8] sm:$0xff]
    %v1135 = vld [vmem:[#allocation6 + $0x10] sm:$0xff]
    %v1136 = vld [vmem:[#allocation6 + $0x18] sm:$0xff]
    %v1137 = vld [vmem:[#allocation6 + $0x20] sm:$0xff]
    %v1138 = vld [vmem:[#allocation6 + $0x28] sm:$0xff]
    %v1139 = vld [vmem:[#allocation6 + $0x30] sm:$0xff]
    %v1140 = vld [vmem:[#allocation6 + $0x38] sm:$0xff]
    %v1141 = vld [vmem:[#allocation6 + $0x40] sm:$0xff]
    %v1142 = vld [vmem:[#allocation6 + $0x48] sm:$0xff]
    %v1143 = vld [vmem:[#allocation6 + $0x50] sm:$0xff]
    %v1144 = vld [vmem:[#allocation6 + $0x58] sm:$0xff]
    %v1145 = vld [vmem:[#allocation6 + $0x60] sm:$0xff]
    %v1146 = vld [vmem:[#allocation6 + $0x68] sm:$0xff]
    %v1147 = vld [vmem:[#allocation6 + $0x70] sm:$0xff]
    %v1148 = vld [vmem:[#allocation6 + $0x78] sm:$0xff]
    %v1149 = vld [vmem:[#allocation7] sm:$0x1]
    %v1151 = vlaneseq
    %v1152 = vshrl.u32 %v1151, 7
    %v1153 = vsub.s32 0, %v1152
    %v1154 = vrot.slane %v1149, %v1153
    %1156 = vmatprep.subr.mxu0 0.0
    %1157 = vmatpush1.msra.mxu0 %v1133
    %1158 = vmatprep.subr.mxu0 0.0
    %1159 = vmatpush1.msra.mxu0 %v1134
    %1160 = vmatprep.subr.mxu0 0.0
    %1161 = vmatpush1.msra.mxu0 %v1135
    %1162 = vmatprep.subr.mxu0 0.0
    %1163 = vmatpush1.msra.mxu0 %v1136
    %1164 = vmatprep.subr.mxu0 0.0
    %1165 = vmatpush1.msra.mxu0 %v1137
    %1166 = vmatprep.subr.mxu0 0.0
    %1167 = vmatpush1.msra.mxu0 %v1138
    %1168 = vmatprep.subr.mxu0 0.0
    %1169 = vmatpush1.msra.mxu0 %v1139
    %1170 = vmatprep.subr.mxu0 0.0
    %1171 = vmatpush1.msra.mxu0 %v1140
    %1172 = vmatprep.subr.mxu0 0.0
    %1173 = vmatpush1.msra.mxu0 %v1141
    %1174 = vmatprep.subr.mxu0 0.0
    %1175 = vmatpush1.msra.mxu0 %v1142
    %1176 = vmatprep.subr.mxu0 0.0
    %1177 = vmatpush1.msra.mxu0 %v1143
    %1178 = vmatprep.subr.mxu0 0.0
    %1179 = vmatpush1.msra.mxu0 %v1144
    %1180 = vmatprep.subr.mxu0 0.0
    %1181 = vmatpush1.msra.mxu0 %v1145
    %1182 = vmatprep.subr.mxu0 0.0
    %1183 = vmatpush1.msra.mxu0 %v1146
    %1184 = vmatprep.subr.mxu0 0.0
    %1185 = vmatpush1.msra.mxu0 %v1147
    %1186 = vmatprep.subr.mxu0 0.0
    %1187 = vmatpush1.msra.mxu0 %v1148
    %1188 = vmatprep.subr.mxu0 0.0
    %1189 = vmatpush1.msra.mxu0 0.0
    %1190 = vmatprep.subr.mxu0 0.0
    %1191 = vmatpush1.msra.mxu0 0.0
    %1192 = vmatprep.subr.mxu0 0.0
    %1193 = vmatpush1.msra.mxu0 0.0
    %1194 = vmatprep.subr.mxu0 0.0
    %1195 = vmatpush1.msra.mxu0 0.0
    %1196 = vmatprep.subr.mxu0 0.0
    %1197 = vmatpush1.msra.mxu0 0.0
    %1198 = vmatprep.subr.mxu0 0.0
    %1199 = vmatpush1.msra.mxu0 0.0
    %1200 = vmatprep.subr.mxu0 0.0
    %1201 = vmatpush1.msra.mxu0 0.0
    %1202 = vmatprep.subr.mxu0 0.0
    %1203 = vmatpush1.msra.mxu0 0.0
    %1204 = vmatprep.subr.mxu0 0.0
    %1205 = vmatpush1.msra.mxu0 0.0
    %1206 = vmatprep.subr.mxu0 0.0
    %1207 = vmatpush1.msra.mxu0 0.0
    %1208 = vmatprep.subr.mxu0 0.0
    %1209 = vmatpush1.msra.mxu0 0.0
    %1210 = vmatprep.subr.mxu0 0.0
    %1211 = vmatpush1.msra.mxu0 0.0
    %1212 = vmatprep.subr.mxu0 0.0
    %1213 = vmatpush1.msra.mxu0 0.0
    %1214 = vmatprep.subr.mxu0 0.0
    %1215 = vmatpush1.msra.mxu0 0.0
    %1216 = vmatprep.subr.mxu0 0.0
    %1217 = vmatpush1.msra.mxu0 0.0
    %1218 = vmatprep.subr.mxu0 0.0
    %1219 = vmatpush1.msra.mxu0 0.0
    %1220 = vmatprep.mubr.f32.mxu0 0.0
    %1221 = vmatmul.mubr.f32.gmra.mrb[0].mxu0 %v1132
    %v1222 = vpop.f32.mrb[0].mxu0
    %v1223 = vadd.f32 %v1154, %v1222
    %v1224 = vpop.f32.mrb[0].mxu0
    %1225 = vdwg.mxu0
    %v1226 = vmax.f32 %v1223, 0.0
    %v1227 = vld [vmem:[#allocation9] sm:$0xff]
    %v1228 = vld [vmem:[#allocation9 + $0x8] sm:$0xff]
    %v1229 = vld [vmem:[#allocation9 + $0x10] sm:$0xff]
    %v1230 = vld [vmem:[#allocation9 + $0x18] sm:$0xff]
    %v1231 = vld [vmem:[#allocation9 + $0x20] sm:$0xff]
    %v1232 = vld [vmem:[#allocation9 + $0x28] sm:$0xff]
    %v1233 = vld [vmem:[#allocation9 + $0x30] sm:$0xff]
    %v1234 = vld [vmem:[#allocation9 + $0x38] sm:$0xff]
    %v1235 = vld [vmem:[#allocation9 + $0x40] sm:$0xff]
    %v1236 = vld [vmem:[#allocation9 + $0x48] sm:$0xff]
    %v1237 = vld [vmem:[#allocation9 + $0x50] sm:$0xff]
    %v1238 = vld [vmem:[#allocation9 + $0x58] sm:$0xff]
    %v1239 = vld [vmem:[#allocation9 + $0x60] sm:$0xff]
    %v1240 = vld [vmem:[#allocation9 + $0x68] sm:$0xff]
    %v1241 = vld [vmem:[#allocation9 + $0x70] sm:$0xff]
    %v1242 = vld [vmem:[#allocation9 + $0x78] sm:$0xff]
    %v1243 = vld [vmem:[#allocation10] sm:$0x1]
    %v1245 = vlaneseq
    %v1246 = vshrl.u32 %v1245, 7
    %v1247 = vsub.s32 0, %v1246
    %v1248 = vrot.slane %v1243, %v1247
    %1250 = vmatprep.subr.mxu0 0.0
    %1251 = vmatpush1.msra.mxu0 %v1227
    %1252 = vmatprep.subr.mxu0 0.0
    %1253 = vmatpush1.msra.mxu0 %v1228
    %1254 = vmatprep.subr.mxu0 0.0
    %1255 = vmatpush1.msra.mxu0 %v1229
    %1256 = vmatprep.subr.mxu0 0.0
    %1257 = vmatpush1.msra.mxu0 %v1230
    %1258 = vmatprep.subr.mxu0 0.0
    %1259 = vmatpush1.msra.mxu0 %v1231
    %1260 = vmatprep.subr.mxu0 0.0
    %1261 = vmatpush1.msra.mxu0 %v1232
    %1262 = vmatprep.subr.mxu0 0.0
    %1263 = vmatpush1.msra.mxu0 %v1233
    %1264 = vmatprep.subr.mxu0 0.0
    %1265 = vmatpush1.msra.mxu0 %v1234
    %1266 = vmatprep.subr.mxu0 0.0
    %1267 = vmatpush1.msra.mxu0 %v1235
    %1268 = vmatprep.subr.mxu0 0.0
    %1269 = vmatpush1.msra.mxu0 %v1236
    %1270 = vmatprep.subr.mxu0 0.0
    %1271 = vmatpush1.msra.mxu0 %v1237
    %1272 = vmatprep.subr.mxu0 0.0
    %1273 = vmatpush1.msra.mxu0 %v1238
    %1274 = vmatprep.subr.mxu0 0.0
    %1275 = vmatpush1.msra.mxu0 %v1239
    %1276 = vmatprep.subr.mxu0 0.0
    %1277 = vmatpush1.msra.mxu0 %v1240
    %1278 = vmatprep.subr.mxu0 0.0
    %1279 = vmatpush1.msra.mxu0 %v1241
    %1280 = vmatprep.subr.mxu0 0.0
    %1281 = vmatpush1.msra.mxu0 %v1242
    %1282 = vmatprep.subr.mxu0 0.0
    %1283 = vmatpush1.msra.mxu0 0.0
    %1284 = vmatprep.subr.mxu0 0.0
    %1285 = vmatpush1.msra.mxu0 0.0
    %1286 = vmatprep.subr.mxu0 0.0
    %1287 = vmatpush1.msra.mxu0 0.0
    %1288 = vmatprep.subr.mxu0 0.0
    %1289 = vmatpush1.msra.mxu0 0.0
    %1290 = vmatprep.subr.mxu0 0.0
    %1291 = vmatpush1.msra.mxu0 0.0
    %1292 = vmatprep.subr.mxu0 0.0
    %1293 = vmatpush1.msra.mxu0 0.0
    %1294 = vmatprep.subr.mxu0 0.0
    %1295 = vmatpush1.msra.mxu0 0.0
    %1296 = vmatprep.subr.mxu0 0.0
    %1297 = vmatpush1.msra.mxu0 0.0
    %1298 = vmatprep.subr.mxu0 0.0
    %1299 = vmatpush1.msra.mxu0 0.0
    %1300 = vmatprep.subr.mxu0 0.0
    %1301 = vmatpush1.msra.mxu0 0.0
    %1302 = vmatprep.subr.mxu0 0.0
    %1303 = vmatpush1.msra.mxu0 0.0
    %1304 = vmatprep.subr.mxu0 0.0
    %1305 = vmatpush1.msra.mxu0 0.0
    %1306 = vmatprep.subr.mxu0 0.0
    %1307 = vmatpush1.msra.mxu0 0.0
    %1308 = vmatprep.subr.mxu0 0.0
    %1309 = vmatpush1.msra.mxu0 0.0
    %1310 = vmatprep.subr.mxu0 0.0
    %1311 = vmatpush1.msra.mxu0 0.0
    %1312 = vmatprep.subr.mxu0 0.0
    %1313 = vmatpush1.msra.mxu0 0.0
    %1314 = vmatprep.mubr.f32.mxu0 0.0
    %1315 = vmatmul.mubr.f32.gmra.mrb[0].mxu0 %v1226
    %v1316 = vpop.f32.mrb[0].mxu0
    %v1317 = vadd.f32 %v1248, %v1316
    %v1318 = vpop.f32.mrb[0].mxu0
    %1319 = vdwg.mxu0
    %1320 = vst [vmem:[%s7] sm:$0xff] %v1317
    // Predicated region
    $region54: #{classifier_forward.1} parent=1 // pred_check
      _
    $region55: #{classifier_forward.1} parent=1 // pred_check_branch
      %1322 = sbr.rel (0) target = $region57
    $region56: #{classifier_forward.1} parent=1 // pred_region
      _
    $region57: #{classifier_forward.1} parent=1 // pred_fallthru
      _
    // Predicated region
    $region58: #{classifier_forward.1} parent=1 // pred_check
      _
    $region59: #{classifier_forward.1} parent=1 // pred_check_branch
      %1324 = sbr.rel (0) target = $region61
    $region60: #{classifier_forward.1} parent=1 // pred_region
      _
    $region61: #{classifier_forward.1} parent=1 // pred_fallthru
      _
    %1325 = vsyncpa [#allocation3], 1
    %1326 = vsyncpa [#allocation5], 1
    %1327 = vsyncpa [#allocation8], 1
    %1328 = vsyncpa [#allocation11], 1

</llo_original>
